<compile_context>
chip_gen: v5e
topology: v5e:2x2
jax: 0.10.0
libtpu: 0.0.40
codegen_flags: <defaults>
</compile_context>

<pallas_src>
import math
from functools import partial

import jax
import jax.numpy as jnp
import numpy as np
from jax import lax
from jax.experimental import pallas as pl
from jax.experimental.pallas import tpu as pltpu

# ----------------------- hyperparameters (small, deterministic) -----------------------
HYPER = dict(hidden_size=32, nb_filters=32, nb_layers=3, kernel_size=2)
IN_CHANNELS = 8
NUM_TYPES = 5
BATCH = 2
SEQ_LEN = 16
DILATIONS = tuple(2 ** i for i in range(HYPER["nb_layers"]))
LAYER_IN_CH = [IN_CHANNELS] + [HYPER["nb_filters"]] * HYPER["nb_layers"]

CP = 128            # lane width of every activation / weight tile
SLOT = 32           # channel slot width: taps / skip are packed into 32-lane slots
LEAKY_SLOPE = 0.1   # WaveNetIntens uses nn.LeakyReLU(0.1); assumed for DilatedCausalConv1d too


def _leaky(x):
    return jnp.where(x >= 0, x, LEAKY_SLOPE * x)


def _const_rows(nl, num_types):
    """Row layout of the f32 constants slab (sized from the config, no hardcoded 8)."""
    emb0 = 0                         # rows [0, num_types+1): embedding table (f32, exact)
    bias0 = num_types + 1            # rows bias0+2*li (conv bias) / bias0+2*li+1 (skip bias)
    hb = bias0 + 2 * nl              # hidden 1x1 conv bias
    ipv = hb + 1                     # 1 / position_vec (zero past lane IN_CHANNELS)
    ph = ipv + 1                     # sin/cos phase: 0 on even lanes, pi/2 on odd lanes
    rows = ((ph + 1 + 7) // 8) * 8   # pad to sublane multiple
    return emb0, bias0, hb, ipv, ph, rows


# ------------------------------------ kernel ------------------------------------------
def _wavenet_kernel(t_ref, et_ref, w_ref, c_ref, o_ref, *,
                    nb_layers, kernel_size, dilations, seq_len, num_types, nb_filters):
    """Single-step kernel (no grid).

    t_ref  : (B*L, 1)  f32   event times
    et_ref : (B*L, 1)  int32 event types (0 = padding)
    w_ref  : ((nl+1)*CP, CP) bf16 packed weights: per-layer [taps | skip] block + hidden block
    c_ref  : (CROWS, CP) f32 embedding table + biases + 1/position_vec + phase constants
    o_ref  : (B*L, CP) f32   lane-dense output (first hidden_size lanes meaningful)
    """
    K = kernel_size
    nl = nb_layers
    L = seq_len
    F = nb_filters
    BL = t_ref.shape[0]
    emb0, bias0, hb, ipv, ph, _ = _const_rows(nl, num_types)

    cst = c_ref[...]                                   # (CROWS, CP) f32
    t = t_ref[...]                                     # (BL, 1) f32
    et = et_ref[...]                                   # (BL, 1) int32
    m = (et != 0).astype(jnp.float32)                  # (BL, 1) non-pad mask

    inv_pv = cst[ipv:ipv + 1, :]                       # (1, CP)
    phase = cst[ph:ph + 1, :]                          # (1, CP)

    # temporal encoding: sin on even lanes, cos (= sin(.+pi/2)) on odd lanes, masked.
    # Padded lanes (>= IN_CHANNELS) stay exactly 0 because inv_pv/phase are 0 there.
    x = jnp.sin(t * inv_pv + phase) * m                # (BL, CP)

    # embedding lookup as select-accumulate over the num_types nonzero table rows
    # (row 0 is the padding row, all-zero, so it is skipped).
    for r in range(1, num_types + 1):
        x = x + (et == r).astype(jnp.float32) * cst[emb0 + r:emb0 + r + 1, :]

    # in-sequence position of each row (rows ordered b*L + l) and lane mask that keeps
    # activations confined to lanes [0, SLOT) (required by the lane-slot packing below).
    pos = lax.broadcasted_iota(jnp.int32, (BL, CP), 0) % L
    lane = lax.broadcasted_iota(jnp.int32, (BL, CP), 1)

    for li in range(nl):
        d = dilations[li]
        wblk = w_ref[li * CP:(li + 1) * CP, :]          # (CP, CP) bf16 [taps | skip] fused
        bc = cst[bias0 + 2 * li:bias0 + 2 * li + 1, :]  # conv bias (lanes [0,F))
        bs = cst[bias0 + 2 * li + 1:bias0 + 2 * li + 2, :]  # skip bias (lanes [0,F))

        # pack the K causal taps into 32-lane slots of ONE (BL, CP) matmul operand
        xcat = None
        for k in range(K):
            s = (K - 1 - k) * d                        # causal left shift for tap k
            if s == 0:
                xs = x
            else:
                xs = pltpu.roll(x, shift=s, axis=0)    # sublane rotate (XLU)
                xs = jnp.where(pos >= s, xs, 0.0)      # zero rows that wrapped across batch
            if k > 0:
                xs = pltpu.roll(xs, shift=k * SLOT, axis=1)   # move into lane slot k
            xcat = xs if xcat is None else xcat + xs

        # one MXU matmul: cols [0,F) = conv accumulator, cols [SLOT,SLOT+F) = 1x1 skip
        y = jnp.dot(xcat.astype(jnp.bfloat16), wblk,
                    preferred_element_type=jnp.float32)        # (BL, CP) f32
        skip = pltpu.roll(y, shift=CP - SLOT, axis=1)          # align skip with conv lanes
        xr = _leaky(y + bc) + (skip + bs)
        x = jnp.where(lane < SLOT, xr, 0.0)            # re-establish the lane-clean invariant

    whid = w_ref[nl * CP:(nl + 1) * CP, :]             # (CP, CP) hidden 1x1 conv
    bh = cst[hb:hb + 1, :]
    h = _leaky(jnp.dot(x.astype(jnp.bfloat16), whid, preferred_element_type=jnp.float32) + bh)
    o_ref[...] = (h * m).astype(o_ref.dtype)


# ---------------------------------- parameters ----------------------------------------
def init_params(key):
    """Deterministic parameter init mimicking the PyTorch module's __init__."""
    keys = iter(jax.random.split(key, 64))
    K = HYPER["kernel_size"]
    F = HYPER["nb_filters"]

    # nn.Embedding(num_types+1, in_channels, padding_idx=0): N(0,1), row 0 zeroed.
    emb = jax.random.normal(next(keys), (NUM_TYPES + 1, IN_CHANNELS), jnp.float32)
    emb = emb.at[0].set(0.0)

    position_vec = jnp.array(
        [math.pow(10000.0, 2.0 * (i // 2) / IN_CHANNELS) for i in range(IN_CHANNELS)],
        dtype=jnp.float32,
    )[None, :]  # (1, C0)

    layers = []
    for li in range(HYPER["nb_layers"]):
        cin = LAYER_IN_CH[li]
        # dilated conv: kaiming_normal (fan_in = cin*K), bias zeroed (weights_init)
        wc = jax.random.normal(next(keys), (K, cin, F), jnp.float32) * math.sqrt(2.0 / (cin * K))
        bc = jnp.zeros((1, F), jnp.float32)
        # 1x1 skip conv: kaiming_normal (fan_in = cin), bias zeroed
        ws = jax.random.normal(next(keys), (cin, F), jnp.float32) * math.sqrt(2.0 / cin)
        bs = jnp.zeros((1, F), jnp.float32)
        layers.append((wc, bc, ws, bs))

    # hidden 1x1 conv: kaiming_normal (fan_in = F), bias zeroed
    wh = jax.random.normal(next(keys), (F, HYPER["hidden_size"]), jnp.float32) * math.sqrt(2.0 / F)
    bh = jnp.zeros((1, HYPER["hidden_size"]), jnp.float32)

    return dict(emb_table=emb, position_vec=position_vec, layers=layers, hidden=(wh, bh))


def pack_params(params):
    """Pack weights into ONE compact bf16 slab and all constants into ONE f32 slab.

    Per-layer weight block (CP, CP), channels packed into 32-lane slots:
        rows [k*SLOT, k*SLOT+cin), cols [0, F)         = dilated-conv tap k (shift (K-1-k)*d)
        rows [(K-1)*SLOT, ...),    cols [SLOT, SLOT+F) = 1x1 skip conv (unshifted-x slot)
    Hidden block (CP, CP): rows [0, F), cols [0, H).
    Constants slab rows: embedding table, per-layer conv/skip biases, hidden bias,
    1/position_vec, sin/cos phase (all zero outside their meaningful lanes).
    """
    K = HYPER["kernel_size"]
    F = HYPER["nb_filters"]
    H = HYPER["hidden_size"]
    nl = HYPER["nb_layers"]
    assert K * SLOT <= CP and 2 * SLOT <= CP, "lane-slot packing needs K*SLOT, 2*SLOT <= 128"
    assert F <= SLOT and max(LAYER_IN_CH) <= SLOT and H <= CP

    blocks = []
    for (wc, bc, ws, bs) in params["layers"]:
        cin = wc.shape[1]
        blk = np.zeros((CP, CP), np.float32)
        for k in range(K):
            blk[k * SLOT:k * SLOT + cin, 0:F] = np.asarray(wc[k])
        blk[(K - 1) * SLOT:(K - 1) * SLOT + cin, SLOT:SLOT + F] = np.asarray(ws)
        blocks.append(blk)
    wh, bh = params["hidden"]
    hblk = np.zeros((CP, CP), np.float32)
    hblk[0:F, 0:H] = np.asarray(wh)
    blocks.append(hblk)
    w_slab = jnp.asarray(np.concatenate(blocks, axis=0), dtype=jnp.bfloat16)

    emb0, bias0, hb, ipv, ph, crows = _const_rows(nl, NUM_TYPES)
    cst = np.zeros((crows, CP), np.float32)
    cst[emb0:emb0 + NUM_TYPES + 1, 0:IN_CHANNELS] = np.asarray(params["emb_table"])
    for li, (wc, bc, ws, bs) in enumerate(params["layers"]):
        cst[bias0 + 2 * li, 0:F] = np.asarray(bc[0])
        cst[bias0 + 2 * li + 1, 0:F] = np.asarray(bs[0])
    cst[hb, 0:H] = np.asarray(bh[0])
    pv = np.asarray(params["position_vec"][0])
    cst[ipv, 0:IN_CHANNELS] = 1.0 / pv
    cst[ph, 0:IN_CHANNELS] = np.array(
        [0.0 if i % 2 == 0 else math.pi / 2 for i in range(IN_CHANNELS)], np.float32)
    return w_slab, jnp.asarray(cst)


# ----------------------------------- wrapper -------------------------------------------
def wavenet_forward(event_time, event_type, w_slab, c_slab):
    """Pallas implementation of WaveNetIntens.forward. Returns (B, L, hidden_size)."""
    B, L = event_type.shape
    BL = B * L
    H = HYPER["hidden_size"]
    nl = HYPER["nb_layers"]

    # Only trivial reshapes on the host; mask / embedding / planes are built in-kernel.
    t_col = event_time.astype(jnp.float32).reshape(BL, 1)
    et_col = event_type.astype(jnp.int32).reshape(BL, 1)

    kernel = partial(
        _wavenet_kernel,
        nb_layers=nl,
        kernel_size=HYPER["kernel_size"],
        dilations=DILATIONS,
        seq_len=L,
        num_types=NUM_TYPES,
        nb_filters=HYPER["nb_filters"],
    )

    cost = pl.CostEstimate(
        flops=2 * BL * CP * CP * (nl + 1),
        transcendentals=BL * CP,
        bytes_accessed=int(w_slab.size) * 2 + int(c_slab.size) * 4 + BL * 8 + BL * CP * 4,
    )

    # Single step: no grid, whole problem resident in VMEM (total footprint ~160 KiB).
    out = pl.pallas_call(
        kernel,
        out_shape=jax.ShapeDtypeStruct((BL, CP), jnp.float32),
        in_specs=[pl.BlockSpec(memory_space=pltpu.MemorySpace.VMEM)] * 4,
        out_specs=pl.BlockSpec(memory_space=pltpu.MemorySpace.VMEM),
        cost_estimate=cost,
    )(t_col, et_col, w_slab, c_slab)

    # lane-dense (BL, 128) slab -> (B, L, hidden_size)
    return out.reshape(B, L, CP)[:, :, :H]


# ----------------------------- pure-JAX reference --------------------------------------
def wavenet_forward_ref(event_time, event_type, params):
    """Pure-JAX reference matching the PyTorch forward pass (same bf16 matmul precision)."""
    B, L = event_type.shape
    K = HYPER["kernel_size"]

    def mm(a, w):  # mirror the kernel: bf16 inputs, f32 accumulate
        return jnp.einsum("blc,cf->blf", a.astype(jnp.bfloat16), w.astype(jnp.bfloat16),
                          preferred_element_type=jnp.float32)

    mask = (event_type != 0).astype(jnp.float32)[..., None]
    pv = params["position_vec"][0]
    r = event_time.astype(jnp.float32)[..., None] / pv
    parity = jnp.arange(IN_CHANNELS) % 2
    te = jnp.where(parity == 0, jnp.sin(r), jnp.cos(r)) * mask
    x = te + jnp.take(params["emb_table"], event_type, axis=0)         # (B, L, C0)

    for li, (wc, bc, ws, bs) in enumerate(params["layers"]):
        d = DILATIONS[li]
        F = wc.shape[-1]
        acc = jnp.zeros((B, L, F), jnp.float32)
        for k in range(K):
            s = (K - 1 - k) * d
            xs = jnp.pad(x, ((0, 0), (s, 0), (0, 0)))[:, :L, :] if s > 0 else x
            acc = acc + mm(xs, wc[k])
        conv = _leaky(acc + bc)
        skip = mm(x, ws) + bs
        x = conv + skip

    wh, bh = params["hidden"]
    h = _leaky(mm(x, wh) + bh)
    return h * mask


# ------------------------------------- main ---------------------------------------------
if __name__ == "__main__":
    key = jax.random.PRNGKey(0)
    kp, kt, ky = jax.random.split(key, 3)

    params = init_params(kp)
    w_slab, c_slab = pack_params(params)

    event_time = jnp.cumsum(
        jax.random.uniform(kt, (BATCH, SEQ_LEN), minval=0.1, maxval=1.0), axis=1
    )
    event_type = jax.random.randint(ky, (BATCH, SEQ_LEN), 0, NUM_TYPES + 1)
    event_type = event_type.at[:, -3:].set(0)  # trailing padding to exercise the mask

    fwd = jax.jit(wavenet_forward)
    out = fwd(event_time, event_type, w_slab, c_slab)
    out = jax.block_until_ready(out)

    ref = wavenet_forward_ref(event_time, event_type, params)
    np.testing.assert_allclose(np.asarray(out), np.asarray(ref), rtol=1e-3, atol=1e-3)
    print("KERNEL_OK")
</pallas_src>

<mosaic_0001>
module attributes {stable_mosaic.version = 11 : i64} {
  func.func @_wavenet_kernel(%arg0: memref<32x1xf32, #tpu.memory_space<vmem>>, %arg1: memref<32x1xi32, #tpu.memory_space<vmem>>, %arg2: memref<512x128xbf16, #tpu.memory_space<vmem>>, %arg3: memref<16x128xf32, #tpu.memory_space<vmem>>, %arg4: memref<32x128xf32, #tpu.memory_space<vmem>>) attributes {dimension_semantics = [], scalar_prefetch = 0 : i64, scratch_operands = 0 : i64, tpu.core_type = #tpu.core_type<tc>} {
    %c0 = arith.constant 0 : index
    %c0_0 = arith.constant 0 : index
    %0 = vector.load %arg3[%c0, %c0_0] : memref<16x128xf32, #tpu.memory_space<vmem>>, vector<16x128xf32>
    %c0_1 = arith.constant 0 : index
    %c0_2 = arith.constant 0 : index
    %1 = vector.load %arg0[%c0_1, %c0_2] : memref<32x1xf32, #tpu.memory_space<vmem>>, vector<32x1xf32>
    %c0_3 = arith.constant 0 : index
    %c0_4 = arith.constant 0 : index
    %2 = vector.load %arg1[%c0_3, %c0_4] : memref<32x1xi32, #tpu.memory_space<vmem>>, vector<32x1xi32>
    %c0_i32 = arith.constant 0 : i32
    %3 = vector.broadcast %c0_i32 : i32 to vector<32x1xi32>
    %4 = arith.cmpi ne, %2, %3 : vector<32x1xi32>
    %5 = arith.extui %4 : vector<32x1xi1> to vector<32x1xi32>
    %6 = arith.sitofp %5 : vector<32x1xi32> to vector<32x1xf32>
    %7 = vector.extract_strided_slice %0 {offsets = [13, 0], sizes = [1, 128], strides = [1, 1]} : vector<16x128xf32> to vector<1x128xf32>
    %8 = vector.extract_strided_slice %0 {offsets = [14, 0], sizes = [1, 128], strides = [1, 1]} : vector<16x128xf32> to vector<1x128xf32>
    %9 = vector.broadcast %1 : vector<32x1xf32> to vector<32x128xf32>
    %10 = vector.broadcast %7 : vector<1x128xf32> to vector<32x128xf32>
    %11 = arith.mulf %9, %10 : vector<32x128xf32>
    %12 = vector.broadcast %8 : vector<1x128xf32> to vector<32x128xf32>
    %13 = arith.addf %11, %12 : vector<32x128xf32>
    %14 = math.sin %13 : vector<32x128xf32>
    %15 = vector.broadcast %6 : vector<32x1xf32> to vector<32x128xf32>
    %16 = arith.mulf %14, %15 : vector<32x128xf32>
    %c1_i32 = arith.constant 1 : i32
    %17 = vector.broadcast %c1_i32 : i32 to vector<32x1xi32>
    %18 = arith.cmpi eq, %2, %17 : vector<32x1xi32>
    %19 = arith.extui %18 : vector<32x1xi1> to vector<32x1xi32>
    %20 = arith.sitofp %19 : vector<32x1xi32> to vector<32x1xf32>
    %21 = vector.extract_strided_slice %0 {offsets = [1, 0], sizes = [1, 128], strides = [1, 1]} : vector<16x128xf32> to vector<1x128xf32>
    %22 = vector.broadcast %20 : vector<32x1xf32> to vector<32x128xf32>
    %23 = vector.broadcast %21 : vector<1x128xf32> to vector<32x128xf32>
    %24 = arith.mulf %22, %23 : vector<32x128xf32>
    %25 = arith.addf %16, %24 : vector<32x128xf32>
    %c2_i32 = arith.constant 2 : i32
    %26 = vector.broadcast %c2_i32 : i32 to vector<32x1xi32>
    %27 = arith.cmpi eq, %2, %26 : vector<32x1xi32>
    %28 = arith.extui %27 : vector<32x1xi1> to vector<32x1xi32>
    %29 = arith.sitofp %28 : vector<32x1xi32> to vector<32x1xf32>
    %30 = vector.extract_strided_slice %0 {offsets = [2, 0], sizes = [1, 128], strides = [1, 1]} : vector<16x128xf32> to vector<1x128xf32>
    %31 = vector.broadcast %29 : vector<32x1xf32> to vector<32x128xf32>
    %32 = vector.broadcast %30 : vector<1x128xf32> to vector<32x128xf32>
    %33 = arith.mulf %31, %32 : vector<32x128xf32>
    %34 = arith.addf %25, %33 : vector<32x128xf32>
    %c3_i32 = arith.constant 3 : i32
    %35 = vector.broadcast %c3_i32 : i32 to vector<32x1xi32>
    %36 = arith.cmpi eq, %2, %35 : vector<32x1xi32>
    %37 = arith.extui %36 : vector<32x1xi1> to vector<32x1xi32>
    %38 = arith.sitofp %37 : vector<32x1xi32> to vector<32x1xf32>
    %39 = vector.extract_strided_slice %0 {offsets = [3, 0], sizes = [1, 128], strides = [1, 1]} : vector<16x128xf32> to vector<1x128xf32>
    %40 = vector.broadcast %38 : vector<32x1xf32> to vector<32x128xf32>
    %41 = vector.broadcast %39 : vector<1x128xf32> to vector<32x128xf32>
    %42 = arith.mulf %40, %41 : vector<32x128xf32>
    %43 = arith.addf %34, %42 : vector<32x128xf32>
    %c4_i32 = arith.constant 4 : i32
    %44 = vector.broadcast %c4_i32 : i32 to vector<32x1xi32>
    %45 = arith.cmpi eq, %2, %44 : vector<32x1xi32>
    %46 = arith.extui %45 : vector<32x1xi1> to vector<32x1xi32>
    %47 = arith.sitofp %46 : vector<32x1xi32> to vector<32x1xf32>
    %48 = vector.extract_strided_slice %0 {offsets = [4, 0], sizes = [1, 128], strides = [1, 1]} : vector<16x128xf32> to vector<1x128xf32>
    %49 = vector.broadcast %47 : vector<32x1xf32> to vector<32x128xf32>
    %50 = vector.broadcast %48 : vector<1x128xf32> to vector<32x128xf32>
    %51 = arith.mulf %49, %50 : vector<32x128xf32>
    %52 = arith.addf %43, %51 : vector<32x128xf32>
    %c5_i32 = arith.constant 5 : i32
    %53 = vector.broadcast %c5_i32 : i32 to vector<32x1xi32>
    %54 = arith.cmpi eq, %2, %53 : vector<32x1xi32>
    %55 = arith.extui %54 : vector<32x1xi1> to vector<32x1xi32>
    %56 = arith.sitofp %55 : vector<32x1xi32> to vector<32x1xf32>
    %57 = vector.extract_strided_slice %0 {offsets = [5, 0], sizes = [1, 128], strides = [1, 1]} : vector<16x128xf32> to vector<1x128xf32>
    %58 = vector.broadcast %56 : vector<32x1xf32> to vector<32x128xf32>
    %59 = vector.broadcast %57 : vector<1x128xf32> to vector<32x128xf32>
    %60 = arith.mulf %58, %59 : vector<32x128xf32>
    %61 = arith.addf %52, %60 : vector<32x128xf32>
    %62 = tpu.iota {dimensions = array<i32: 0>} : vector<32x128xi32>
    %c16_i32 = arith.constant 16 : i32
    %c0_i32_5 = arith.constant 0 : i32
    %63 = arith.cmpi eq, %c16_i32, %c0_i32_5 : i32
    %c1_i32_6 = arith.constant 1 : i32
    %64 = arith.select %63, %c1_i32_6, %c16_i32 : i32
    %65 = vector.broadcast %64 : i32 to vector<32x128xi32>
    %66 = arith.remsi %62, %65 : vector<32x128xi32>
    %c0_i32_7 = arith.constant 0 : i32
    %67 = vector.broadcast %c0_i32_7 : i32 to vector<32x128xi32>
    %68 = arith.cmpi ne, %66, %67 : vector<32x128xi32>
    %c0_i32_8 = arith.constant 0 : i32
    %69 = vector.broadcast %c0_i32_8 : i32 to vector<32x128xi32>
    %70 = arith.cmpi slt, %66, %69 : vector<32x128xi32>
    %c0_i32_9 = arith.constant 0 : i32
    %71 = arith.cmpi slt, %64, %c0_i32_9 : i32
    %72 = vector.broadcast %71 : i1 to vector<32x128xi1>
    %73 = vector.broadcast %72 : vector<32x128xi1> to vector<32x128xi1>
    %74 = arith.xori %70, %73 : vector<32x128xi1>
    %75 = arith.andi %74, %68 : vector<32x128xi1>
    %76 = vector.broadcast %64 : i32 to vector<32x128xi32>
    %77 = arith.addi %66, %76 : vector<32x128xi32>
    %78 = arith.select %75, %77, %66 : vector<32x128xi1>, vector<32x128xi32>
    %79 = tpu.iota {dimensions = array<i32: 1>} : vector<32x128xi32>
    %c0_10 = arith.constant 0 : index
    %c0_11 = arith.constant 0 : index
    %80 = vector.load %arg2[%c0_10, %c0_11] : memref<512x128xbf16, #tpu.memory_space<vmem>>, vector<128x128xbf16>
    %81 = vector.extract_strided_slice %0 {offsets = [6, 0], sizes = [1, 128], strides = [1, 1]} : vector<16x128xf32> to vector<1x128xf32>
    %82 = vector.extract_strided_slice %0 {offsets = [7, 0], sizes = [1, 128], strides = [1, 1]} : vector<16x128xf32> to vector<1x128xf32>
    %c1_i32_12 = arith.constant 1 : i32
    %83 = tpu.dynamic_rotate %61 by %c1_i32_12 dim 0 : vector<32x128xf32>, i32 -> vector<32x128xf32>
    %c1_i32_13 = arith.constant 1 : i32
    %84 = vector.broadcast %c1_i32_13 : i32 to vector<32x128xi32>
    %85 = arith.cmpi sge, %78, %84 : vector<32x128xi32>
    %cst = arith.constant 0.000000e+00 : f32
    %86 = vector.broadcast %cst : f32 to vector<32x128xf32>
    %87 = arith.select %85, %83, %86 : vector<32x128xi1>, vector<32x128xf32>
    %c32_i32 = arith.constant 32 : i32
    %88 = tpu.dynamic_rotate %61 by %c32_i32 dim 1 : vector<32x128xf32>, i32 -> vector<32x128xf32>
    %89 = arith.addf %87, %88 : vector<32x128xf32>
    %90 = arith.truncf %89 : vector<32x128xf32> to vector<32x128xbf16>
    %cst_14 = arith.constant dense<0.000000e+00> : vector<32x128xf32>
    %91 = tpu.matmul %90, %80, %cst_14 {dimension_numbers = #tpu.dot_dimension_numbers<[1], [0], [0], [1], [0, 0, 1, 1], [], []>} : vector<32x128xbf16>, vector<128x128xbf16>, vector<32x128xf32> -> vector<32x128xf32>
    %c96_i32 = arith.constant 96 : i32
    %92 = tpu.dynamic_rotate %91 by %c96_i32 dim 1 : vector<32x128xf32>, i32 -> vector<32x128xf32>
    %93 = vector.broadcast %81 : vector<1x128xf32> to vector<32x128xf32>
    %94 = arith.addf %91, %93 : vector<32x128xf32>
    %cst_15 = arith.constant 0.000000e+00 : f32
    %95 = vector.broadcast %cst_15 : f32 to vector<32x128xf32>
    %96 = arith.cmpf oge, %94, %95 : vector<32x128xf32>
    %cst_16 = arith.constant 1.000000e-01 : f32
    %97 = vector.broadcast %cst_16 : f32 to vector<32x128xf32>
    %98 = arith.mulf %97, %94 : vector<32x128xf32>
    %99 = arith.select %96, %94, %98 : vector<32x128xi1>, vector<32x128xf32>
    %100 = vector.broadcast %82 : vector<1x128xf32> to vector<32x128xf32>
    %101 = arith.addf %92, %100 : vector<32x128xf32>
    %102 = arith.addf %99, %101 : vector<32x128xf32>
    %c32_i32_17 = arith.constant 32 : i32
    %103 = vector.broadcast %c32_i32_17 : i32 to vector<32x128xi32>
    %104 = arith.cmpi slt, %79, %103 : vector<32x128xi32>
    %cst_18 = arith.constant 0.000000e+00 : f32
    %105 = vector.broadcast %cst_18 : f32 to vector<32x128xf32>
    %106 = arith.select %104, %102, %105 : vector<32x128xi1>, vector<32x128xf32>
    %c128 = arith.constant 128 : index
    %c0_19 = arith.constant 0 : index
    %107 = vector.load %arg2[%c128, %c0_19] : memref<512x128xbf16, #tpu.memory_space<vmem>>, vector<128x128xbf16>
    %108 = vector.extract_strided_slice %0 {offsets = [8, 0], sizes = [1, 128], strides = [1, 1]} : vector<16x128xf32> to vector<1x128xf32>
    %109 = vector.extract_strided_slice %0 {offsets = [9, 0], sizes = [1, 128], strides = [1, 1]} : vector<16x128xf32> to vector<1x128xf32>
    %c2_i32_20 = arith.constant 2 : i32
    %110 = tpu.dynamic_rotate %106 by %c2_i32_20 dim 0 : vector<32x128xf32>, i32 -> vector<32x128xf32>
    %c2_i32_21 = arith.constant 2 : i32
    %111 = vector.broadcast %c2_i32_21 : i32 to vector<32x128xi32>
    %112 = arith.cmpi sge, %78, %111 : vector<32x128xi32>
    %cst_22 = arith.constant 0.000000e+00 : f32
    %113 = vector.broadcast %cst_22 : f32 to vector<32x128xf32>
    %114 = arith.select %112, %110, %113 : vector<32x128xi1>, vector<32x128xf32>
    %c32_i32_23 = arith.constant 32 : i32
    %115 = tpu.dynamic_rotate %106 by %c32_i32_23 dim 1 : vector<32x128xf32>, i32 -> vector<32x128xf32>
    %116 = arith.addf %114, %115 : vector<32x128xf32>
    %117 = arith.truncf %116 : vector<32x128xf32> to vector<32x128xbf16>
    %cst_24 = arith.constant dense<0.000000e+00> : vector<32x128xf32>
    %118 = tpu.matmul %117, %107, %cst_24 {dimension_numbers = #tpu.dot_dimension_numbers<[1], [0], [0], [1], [0, 0, 1, 1], [], []>} : vector<32x128xbf16>, vector<128x128xbf16>, vector<32x128xf32> -> vector<32x128xf32>
    %c96_i32_25 = arith.constant 96 : i32
    %119 = tpu.dynamic_rotate %118 by %c96_i32_25 dim 1 : vector<32x128xf32>, i32 -> vector<32x128xf32>
    %120 = vector.broadcast %108 : vector<1x128xf32> to vector<32x128xf32>
    %121 = arith.addf %118, %120 : vector<32x128xf32>
    %cst_26 = arith.constant 0.000000e+00 : f32
    %122 = vector.broadcast %cst_26 : f32 to vector<32x128xf32>
    %123 = arith.cmpf oge, %121, %122 : vector<32x128xf32>
    %cst_27 = arith.constant 1.000000e-01 : f32
    %124 = vector.broadcast %cst_27 : f32 to vector<32x128xf32>
    %125 = arith.mulf %124, %121 : vector<32x128xf32>
    %126 = arith.select %123, %121, %125 : vector<32x128xi1>, vector<32x128xf32>
    %127 = vector.broadcast %109 : vector<1x128xf32> to vector<32x128xf32>
    %128 = arith.addf %119, %127 : vector<32x128xf32>
    %129 = arith.addf %126, %128 : vector<32x128xf32>
    %c32_i32_28 = arith.constant 32 : i32
    %130 = vector.broadcast %c32_i32_28 : i32 to vector<32x128xi32>
    %131 = arith.cmpi slt, %79, %130 : vector<32x128xi32>
    %cst_29 = arith.constant 0.000000e+00 : f32
    %132 = vector.broadcast %cst_29 : f32 to vector<32x128xf32>
    %133 = arith.select %131, %129, %132 : vector<32x128xi1>, vector<32x128xf32>
    %c256 = arith.constant 256 : index
    %c0_30 = arith.constant 0 : index
    %134 = vector.load %arg2[%c256, %c0_30] : memref<512x128xbf16, #tpu.memory_space<vmem>>, vector<128x128xbf16>
    %135 = vector.extract_strided_slice %0 {offsets = [10, 0], sizes = [1, 128], strides = [1, 1]} : vector<16x128xf32> to vector<1x128xf32>
    %136 = vector.extract_strided_slice %0 {offsets = [11, 0], sizes = [1, 128], strides = [1, 1]} : vector<16x128xf32> to vector<1x128xf32>
    %c4_i32_31 = arith.constant 4 : i32
    %137 = tpu.dynamic_rotate %133 by %c4_i32_31 dim 0 : vector<32x128xf32>, i32 -> vector<32x128xf32>
    %c4_i32_32 = arith.constant 4 : i32
    %138 = vector.broadcast %c4_i32_32 : i32 to vector<32x128xi32>
    %139 = arith.cmpi sge, %78, %138 : vector<32x128xi32>
    %cst_33 = arith.constant 0.000000e+00 : f32
    %140 = vector.broadcast %cst_33 : f32 to vector<32x128xf32>
    %141 = arith.select %139, %137, %140 : vector<32x128xi1>, vector<32x128xf32>
    %c32_i32_34 = arith.constant 32 : i32
    %142 = tpu.dynamic_rotate %133 by %c32_i32_34 dim 1 : vector<32x128xf32>, i32 -> vector<32x128xf32>
    %143 = arith.addf %141, %142 : vector<32x128xf32>
    %144 = arith.truncf %143 : vector<32x128xf32> to vector<32x128xbf16>
    %cst_35 = arith.constant dense<0.000000e+00> : vector<32x128xf32>
    %145 = tpu.matmul %144, %134, %cst_35 {dimension_numbers = #tpu.dot_dimension_numbers<[1], [0], [0], [1], [0, 0, 1, 1], [], []>} : vector<32x128xbf16>, vector<128x128xbf16>, vector<32x128xf32> -> vector<32x128xf32>
    %c96_i32_36 = arith.constant 96 : i32
    %146 = tpu.dynamic_rotate %145 by %c96_i32_36 dim 1 : vector<32x128xf32>, i32 -> vector<32x128xf32>
    %147 = vector.broadcast %135 : vector<1x128xf32> to vector<32x128xf32>
    %148 = arith.addf %145, %147 : vector<32x128xf32>
    %cst_37 = arith.constant 0.000000e+00 : f32
    %149 = vector.broadcast %cst_37 : f32 to vector<32x128xf32>
    %150 = arith.cmpf oge, %148, %149 : vector<32x128xf32>
    %cst_38 = arith.constant 1.000000e-01 : f32
    %151 = vector.broadcast %cst_38 : f32 to vector<32x128xf32>
    %152 = arith.mulf %151, %148 : vector<32x128xf32>
    %153 = arith.select %150, %148, %152 : vector<32x128xi1>, vector<32x128xf32>
    %154 = vector.broadcast %136 : vector<1x128xf32> to vector<32x128xf32>
    %155 = arith.addf %146, %154 : vector<32x128xf32>
    %156 = arith.addf %153, %155 : vector<32x128xf32>
    %c32_i32_39 = arith.constant 32 : i32
    %157 = vector.broadcast %c32_i32_39 : i32 to vector<32x128xi32>
    %158 = arith.cmpi slt, %79, %157 : vector<32x128xi32>
    %cst_40 = arith.constant 0.000000e+00 : f32
    %159 = vector.broadcast %cst_40 : f32 to vector<32x128xf32>
    %160 = arith.select %158, %156, %159 : vector<32x128xi1>, vector<32x128xf32>
    %c384 = arith.constant 384 : index
    %c0_41 = arith.constant 0 : index
    %161 = vector.load %arg2[%c384, %c0_41] : memref<512x128xbf16, #tpu.memory_space<vmem>>, vector<128x128xbf16>
    %162 = vector.extract_strided_slice %0 {offsets = [12, 0], sizes = [1, 128], strides = [1, 1]} : vector<16x128xf32> to vector<1x128xf32>
    %163 = arith.truncf %160 : vector<32x128xf32> to vector<32x128xbf16>
    %cst_42 = arith.constant dense<0.000000e+00> : vector<32x128xf32>
    %164 = tpu.matmul %163, %161, %cst_42 {dimension_numbers = #tpu.dot_dimension_numbers<[1], [0], [0], [1], [0, 0, 1, 1], [], []>} : vector<32x128xbf16>, vector<128x128xbf16>, vector<32x128xf32> -> vector<32x128xf32>
    %165 = vector.broadcast %162 : vector<1x128xf32> to vector<32x128xf32>
    %166 = arith.addf %164, %165 : vector<32x128xf32>
    %cst_43 = arith.constant 0.000000e+00 : f32
    %167 = vector.broadcast %cst_43 : f32 to vector<32x128xf32>
    %168 = arith.cmpf oge, %166, %167 : vector<32x128xf32>
    %cst_44 = arith.constant 1.000000e-01 : f32
    %169 = vector.broadcast %cst_44 : f32 to vector<32x128xf32>
    %170 = arith.mulf %169, %166 : vector<32x128xf32>
    %171 = arith.select %168, %166, %170 : vector<32x128xi1>, vector<32x128xf32>
    %172 = vector.broadcast %6 : vector<32x1xf32> to vector<32x128xf32>
    %173 = arith.mulf %171, %172 : vector<32x128xf32>
    %c0_45 = arith.constant 0 : index
    %c0_46 = arith.constant 0 : index
    %174 = vector.load %arg4[%c0_45, %c0_46] : memref<32x128xf32, #tpu.memory_space<vmem>>, vector<32x128xf32>
    tpu.vector_store %arg4[%c0_45, %c0_46], %173 {strides = array<i32>} : memref<32x128xf32, #tpu.memory_space<vmem>>, vector<32x128xf32>,
    return
  }
}

</mosaic_0001>

<llo_original>
// kernel: wavenet_forward.1
$region0: #{wavenet_forward.1}
  #allocation0 [shape = 'u32[]', space=smem, size = 0x4, offset = 0x4, fixed_abs, tag = 'smem constant byte address 0x4 - core index']
  #allocation1 [shape = 'u32[72,128]{1,0:T(1,128)}', space=vmem, size = 0x9000, scoped, tag = 'internal scratch']
  %s0 = inlined_call_operand.vmem [shape: f32[32,1], index: 0, kind: input, shape index: {}]
  %s1 = inlined_call_operand.vmem [shape: s32[32,1], index: 1, kind: input, shape index: {}]
  %s2 = inlined_call_operand.hbm [shape: bf16[512,128], index: 2, kind: input, shape index: {}]
  %s3 = inlined_call_operand.vmem [shape: f32[16,128], index: 3, kind: input, shape index: {}]
  %s4 = inlined_call_operand.hbm [shape: f32[32,128], index: 4, kind: output, shape index: {}]
  %s5 = sld [smem:[#allocation0]]
  $region30: #{wavenet_forward.1} parent=0
    _
  %s7 = ssub.s32 1, %s5
  %s8 = scalar_select 0, %s7, %s5
  $region1: #{wavenet_forward.1} parent=0
    #allocation2 [shape = 'u8[131072]{0}', space=vmem, size = 0x20000, scoped, tag = 'input window, operand 2, single buffered']
    #allocation3 [shape = 's32[1]{0}', space=sflag, size = 0x4, scoped, tag = 'scoped memory for wavenet_forward.1']
    #allocation4 [shape = 's32[1]{0}', space=sflag, size = 0x4, scoped, tag = 'scoped memory for wavenet_forward.1']
    #allocation5 [shape = 'u8[16384]{0}', space=vmem, size = 0x4000, scoped, tag = 'output window, operand 0, single buffered']
    %9 = vsyncpa [#allocation3], 0
    %10 = vsyncpa [#allocation4], 0
    // Predicated region
    $region2: #{wavenet_forward.1} parent=1 // pred_check
      _
    $region3: #{wavenet_forward.1} parent=1 // pred_check_branch
      %12 = sbr.rel (0) target = $region5
    $region4: #{wavenet_forward.1} parent=1 // pred_region
      _
    $region5: #{wavenet_forward.1} parent=1 // pred_fallthru
      _
    // Predicated region
    $region6: #{wavenet_forward.1} parent=1 // pred_check
      _
    $region7: #{wavenet_forward.1} parent=1 // pred_check_branch
      %14 = sbr.rel (0) target = $region9
    $region8: #{wavenet_forward.1} parent=1 // pred_region
      _
    $region9: #{wavenet_forward.1} parent=1 // pred_fallthru
      _
    // Predicated region
    $region10: #{wavenet_forward.1} parent=1 // pred_check
      _
    $region11: #{wavenet_forward.1} parent=1 // pred_check_branch
      %16 = sbr.rel (0) target = $region13
    $region12: #{wavenet_forward.1} parent=1 // pred_region
      %18 = vsyncadd [#allocation3], 0
      %s19 = sshll.u32 %s2, 4
      %s20 = int_to_ptr.hbm [resolvable:$true] %s19
      %s21 = sshll.u32 [#allocation2], 4
      %s22 = int_to_ptr.vmem [resolvable:$true] %s21
      %27 = dma.hbm_to_vmem [thread:$0]  %s20, 4096, %s22, [#allocation3], 64, 64, 4
    $region13: #{wavenet_forward.1} parent=1 // pred_fallthru
      _
    // Predicated region
    $region14: #{wavenet_forward.1} parent=1 // pred_check
      _
    $region15: #{wavenet_forward.1} parent=1 // pred_check_branch
      %29 = sbr.rel (0) target = $region17
    $region16: #{wavenet_forward.1} parent=1 // pred_region
      _
    $region17: #{wavenet_forward.1} parent=1 // pred_fallthru
      _
    // Predicated region
    $region18: #{wavenet_forward.1} parent=1 // pred_check
      _
    $region19: #{wavenet_forward.1} parent=1 // pred_check_branch
      %31 = sbr.rel (0) target = $region21
    $region20: #{wavenet_forward.1} parent=1 // pred_region
      %33 = dma.done [#allocation3], 4096
    $region21: #{wavenet_forward.1} parent=1 // pred_fallthru
      _
    %v34 = vld [vmem:[%s3] sm:$0xff]
    %v35 = vld [vmem:[%s3 + $0x8] sm:$0xff]
    %v36 = vld [vmem:[%s0] sm:$0xff]
    %v37 = vld [vmem:[%s0 + $0x8] sm:$0xff]
    %v38 = vld [vmem:[%s0 + $0x10] sm:$0xff]
    %v39 = vld [vmem:[%s0 + $0x18] sm:$0xff]
    %v40 = vld [vmem:[%s1] sm:$0xff]
    %v41 = vld [vmem:[%s1 + $0x8] sm:$0xff]
    %v42 = vld [vmem:[%s1 + $0x10] sm:$0xff]
    %v43 = vld [vmem:[%s1 + $0x18] sm:$0xff]
    %vm44 = vcmp.ne.s32.totalorder %v40, 0
    %vm45 = vcmp.ne.s32.totalorder %v41, 0
    %vm46 = vcmp.ne.s32.totalorder %v42, 0
    %vm47 = vcmp.ne.s32.totalorder %v43, 0
    %v48 = vsel %vm44, 1, 0
    %v49 = vsel %vm45, 1, 0
    %v50 = vsel %vm46, 1, 0
    %v51 = vsel %vm47, 1, 0
    %v52 = vcvt.s32.f32 %v48
    %v53 = vcvt.s32.f32 %v49
    %v54 = vcvt.s32.f32 %v50
    %v55 = vcvt.s32.f32 %v51
    %57 = vset.pattern.permute.xlu0 0
    %58 = vperm.xlu0 %57, %v36
    %v59 = vpop.permute.xlu0 %58
    %62 = vset.pattern.permute.xlu0 0
    %63 = vperm.xlu0 %62, %v37
    %v64 = vpop.permute.xlu0 %63
    %67 = vset.pattern.permute.xlu0 0
    %68 = vperm.xlu0 %67, %v38
    %v69 = vpop.permute.xlu0 %68
    %72 = vset.pattern.permute.xlu0 0
    %73 = vperm.xlu0 %72, %v39
    %v74 = vpop.permute.xlu0 %73
    %v76 = vperm.slane %v35, 5
    %v77 = vmul.f32 %v59, %v76
    %v78 = vmul.f32 %v64, %v76
    %v79 = vmul.f32 %v69, %v76
    %v80 = vmul.f32 %v74, %v76
    %v81 = vperm.slane %v35, 6
    %v82 = vadd.f32 %v77, %v81
    %v83 = vadd.f32 %v78, %v81
    %v84 = vadd.f32 %v79, %v81
    %v85 = vadd.f32 %v80, %v81
    %v86 = vand.u32 2147483647, %v82
    %vm87 = vcmp.le.f32.partialorder %v86, 0.7853982
    %vm88 = vcmp.lt.s32.totalorder %v82, 0
    %v89 = vand.u32 %v82, 2139095040
    %v90 = vshrl.u32 %v89, 23
    %v91 = vsub.s32 %v90, 127
    %v92 = vand.u32 2147483647, %v82
    %v93 = vand.u32 %v92, 8388607
    %v94 = vor.u32 %v93, 8388608
    %v95 = vsub.s32 0, %v94
    %v96 = vadd.s32 %v91, 1
    %vm97 = vcmp.gt.s32.totalorder %v96, 0
    %v98 = vsel %vm97, %v96, 0
    %v99 = vshrl.u32 %v98, 5
    %v100 = vand.u32 %v98, 31
    %v101 = vsub.s32 32, %v100
    %v102 = vshrl.u32 683565275, %v101
    %v103 = vshll.u32 683565275, %v100
    %v104 = vshrl.u32 2475754826, %v101
    %v105 = vor.u32 %v103, %v104
    %v106 = vshll.u32 2475754826, %v100
    %v107 = vshrl.u32 2131351028, %v101
    %v108 = vor.u32 %v106, %v107
    %v109 = vshll.u32 2131351028, %v100
    %v110 = vshrl.u32 2102212464, %v101
    %v111 = vor.u32 %v109, %v110
    %v112 = vshll.u32 2102212464, %v100
    %v113 = vshrl.u32 920167782, %v101
    %v114 = vor.u32 %v112, %v113
    %v115 = vshll.u32 920167782, %v100
    %v116 = vshrl.u32 1326507024, %v101
    %v117 = vor.u32 %v115, %v116
    %vm118 = vcmp.lt.s32.totalorder %v99, 1
    %vm119 = vcmp.lt.s32.totalorder %v99, 2
    %vm120 = vcmp.lt.s32.totalorder %v99, 3
    %vm121 = vcmp.lt.s32.totalorder %v99, 4
    %v122 = vsel %vm118, %v102, %v105
    %v123 = vsel %vm121, %v111, 2102212464
    %v124 = vsel %vm120, %v108, %v123
    %v125 = vsel %vm119, %v122, %v124
    %v126 = vsel %vm118, %v105, %v108
    %v127 = vsel %vm121, %v114, 920167782
    %v128 = vsel %vm120, %v111, %v127
    %v129 = vsel %vm119, %v126, %v128
    %v130 = vsel %vm118, %v108, %v111
    %v131 = vsel %vm121, %v117, 1326507024
    %v132 = vsel %vm120, %v114, %v131
    %v133 = vsel %vm119, %v130, %v132
    %v134 = vshll.u32 %v94, 8
    %v135 = vand.u32 %v134, 65535
    %v136 = vshrl.u32 %v134, 16
    %v137 = vand.u32 %v133, 65535
    %v138 = vshrl.u32 %v133, 16
    %v139 = vmul.u32 %v135, %v137
    %v140 = vmul.u32 %v135, %v138
    %v141 = vmul.u32 %v136, %v137
    %v142 = vmul.u32 %v136, %v138
    %v143 = vshll.u32 %v140, 16
    %v144 = vshrl.u32 %v140, 16
    %v145 = vshll.u32 %v141, 16
    %v146 = vshrl.u32 %v141, 16
    %vm147 = vc.u32 %v139, %v143
    %v148 = vsel %vm147, 1, 0
    %v149 = vadd.s32 %v139, %v143
    %v150 = vadd.s32 %v142, %v148
    %vm151 = vc.u32 %v149, %v145
    %v152 = vsel %vm151, 1, 0
    %v153 = vadd.s32 %v149, %v145
    %v154 = vadd.s32 %v150, %v152
    %v155 = vadd.s32 %v154, %v144
    %v156 = vadd.s32 %v155, %v146
    %v157 = vand.u32 %v134, 65535
    %v158 = vshrl.u32 %v134, 16
    %v159 = vand.u32 %v129, 65535
    %v160 = vshrl.u32 %v129, 16
    %v161 = vmul.u32 %v157, %v159
    %v162 = vmul.u32 %v157, %v160
    %v163 = vmul.u32 %v158, %v159
    %v164 = vmul.u32 %v158, %v160
    %v165 = vshll.u32 %v162, 16
    %v166 = vshrl.u32 %v162, 16
    %v167 = vshll.u32 %v163, 16
    %v168 = vshrl.u32 %v163, 16
    %vm169 = vc.u32 %v161, %v165
    %v170 = vsel %vm169, 1, 0
    %v171 = vadd.s32 %v161, %v165
    %v172 = vadd.s32 %v164, %v170
    %vm173 = vc.u32 %v171, %v167
    %v174 = vsel %vm173, 1, 0
    %v175 = vadd.s32 %v171, %v167
    %v176 = vadd.s32 %v172, %v174
    %v177 = vadd.s32 %v176, %v166
    %v178 = vadd.s32 %v177, %v168
    %v179 = vmul.u32 %v134, %v125
    %v180 = vadd.s32 %v156, %v175
    %vm181 = vc.u32 %v156, %v175
    %v182 = vadd.s32 %v178, 1
    %v183 = vsel %vm181, %v182, %v178
    %v184 = vadd.s32 %v179, %v183
    %v185 = vadd.s32 %v184, 536870912
    %v186 = vshrl.u32 %v185, 30
    %v187 = vshll.u32 %v186, 30
    %v188 = vsub.s32 %v184, %v187
    %vm189 = vcmp.lt.s32.totalorder %v188, 0
    %v190 = vsub.s32 0, %v188
    %v191 = vsel %vm189, %v190, %v188
    %v192 = vclz %v191
    %v193 = vsub.s32 %v192, 2
    %vm194 = vcmp.gt.s32.totalorder 0, %v193
    %v195 = vsel %vm194, 0, %v193
    %v196 = vsub.s32 32, %v195
    %v197 = vshll.u32 %v188, %v195
    %v198 = vshrl.u32 %v180, %v196
    %v199 = vor.u32 %v197, %v198
    %v200 = vsub.s32 4294967266, %v195
    %v201 = vadd.s32 %v200, 127
    %v202 = vshll.u32 %v201, 23
    %v203 = vor.u32 4788187, %v202
    %v204 = vand.u32 2147483647, %v203
    %v206 = vcvt.s32.f32 %v199
    %v207 = vmul.f32 %v206, %v204
    %v208 = vxor.u32 %v207, 2147483648
    %v209 = vsel %vm88, %v208, %v207
    %v210 = vsub.s32 4, %v186
    %v211 = vsel %vm88, %v210, %v186
    %v212 = vsel %vm87, %v82, %v209
    %v213 = vsel %vm87, 0, %v211
    %v214 = vmul.f32 %v212, %v212
    %v215 = vmul.f32 %v214, -0.001358992
    %v216 = vadd.f32 %v215, 0.041655596
    %v217 = vmul.f32 %v214, %v216
    %v218 = vadd.f32 %v217, -0.4999988
    %v219 = vmul.f32 %v214, %v218
    %v220 = vadd.f32 1.0, %v219
    %v221 = vmul.f32 %v212, %v212
    %v222 = vmul.f32 %v221, -0.00019511016
    %v223 = vadd.f32 %v222, 0.008332121
    %v224 = vmul.f32 %v221, %v223
    %v225 = vadd.f32 %v224, -0.16666654
    %v226 = vmul.f32 %v221, %v225
    %v227 = vadd.f32 %v226, 1.0
    %v228 = vmul.f32 %v227, %v212
    %vm229 = vweird.f32 %v82
    %v230 = vadd.s32 %v213, 3
    %v231 = vand.u32 %v230, 3
    %vm232 = vcmp.lt.s32.totalorder %v231, 2
    %vm233 = vcmp.eq.s32.totalorder %v231, 0
    %v234 = vxor.u32 %v228, 2147483648
    %v235 = vsel %vm233, %v220, %v234
    %vm236 = vcmp.eq.s32.totalorder %v231, 2
    %v237 = vxor.u32 %v220, 2147483648
    %v238 = vsel %vm236, %v237, %v228
    %v239 = vsel %vm232, %v235, %v238
    %v240 = vsel %vm229, nan, %v239
    %v241 = vand.u32 2147483647, %v83
    %vm242 = vcmp.le.f32.partialorder %v241, 0.7853982
    %vm243 = vcmp.lt.s32.totalorder %v83, 0
    %v244 = vand.u32 %v83, 2139095040
    %v245 = vshrl.u32 %v244, 23
    %v246 = vsub.s32 %v245, 127
    %v247 = vand.u32 2147483647, %v83
    %v248 = vand.u32 %v247, 8388607
    %v249 = vor.u32 %v248, 8388608
    %v250 = vsub.s32 0, %v249
    %v251 = vadd.s32 %v246, 1
    %vm252 = vcmp.gt.s32.totalorder %v251, 0
    %v253 = vsel %vm252, %v251, 0
    %v254 = vshrl.u32 %v253, 5
    %v255 = vand.u32 %v253, 31
    %v256 = vsub.s32 32, %v255
    %v257 = vshrl.u32 683565275, %v256
    %v258 = vshll.u32 683565275, %v255
    %v259 = vshrl.u32 2475754826, %v256
    %v260 = vor.u32 %v258, %v259
    %v261 = vshll.u32 2475754826, %v255
    %v262 = vshrl.u32 2131351028, %v256
    %v263 = vor.u32 %v261, %v262
    %v264 = vshll.u32 2131351028, %v255
    %v265 = vshrl.u32 2102212464, %v256
    %v266 = vor.u32 %v264, %v265
    %v267 = vshll.u32 2102212464, %v255
    %v268 = vshrl.u32 920167782, %v256
    %v269 = vor.u32 %v267, %v268
    %v270 = vshll.u32 920167782, %v255
    %v271 = vshrl.u32 1326507024, %v256
    %v272 = vor.u32 %v270, %v271
    %vm273 = vcmp.lt.s32.totalorder %v254, 1
    %vm274 = vcmp.lt.s32.totalorder %v254, 2
    %vm275 = vcmp.lt.s32.totalorder %v254, 3
    %vm276 = vcmp.lt.s32.totalorder %v254, 4
    %v277 = vsel %vm273, %v257, %v260
    %v278 = vsel %vm276, %v266, 2102212464
    %v279 = vsel %vm275, %v263, %v278
    %v280 = vsel %vm274, %v277, %v279
    %v281 = vsel %vm273, %v260, %v263
    %v282 = vsel %vm276, %v269, 920167782
    %v283 = vsel %vm275, %v266, %v282
    %v284 = vsel %vm274, %v281, %v283
    %v285 = vsel %vm273, %v263, %v266
    %v286 = vsel %vm276, %v272, 1326507024
    %v287 = vsel %vm275, %v269, %v286
    %v288 = vsel %vm274, %v285, %v287
    %v289 = vshll.u32 %v249, 8
    %v290 = vand.u32 %v289, 65535
    %v291 = vshrl.u32 %v289, 16
    %v292 = vand.u32 %v288, 65535
    %v293 = vshrl.u32 %v288, 16
    %v294 = vmul.u32 %v290, %v292
    %v295 = vmul.u32 %v290, %v293
    %v296 = vmul.u32 %v291, %v292
    %v297 = vmul.u32 %v291, %v293
    %v298 = vshll.u32 %v295, 16
    %v299 = vshrl.u32 %v295, 16
    %v300 = vshll.u32 %v296, 16
    %v301 = vshrl.u32 %v296, 16
    %vm302 = vc.u32 %v294, %v298
    %v303 = vsel %vm302, 1, 0
    %v304 = vadd.s32 %v294, %v298
    %v305 = vadd.s32 %v297, %v303
    %vm306 = vc.u32 %v304, %v300
    %v307 = vsel %vm306, 1, 0
    %v308 = vadd.s32 %v304, %v300
    %v309 = vadd.s32 %v305, %v307
    %v310 = vadd.s32 %v309, %v299
    %v311 = vadd.s32 %v310, %v301
    %v312 = vand.u32 %v289, 65535
    %v313 = vshrl.u32 %v289, 16
    %v314 = vand.u32 %v284, 65535
    %v315 = vshrl.u32 %v284, 16
    %v316 = vmul.u32 %v312, %v314
    %v317 = vmul.u32 %v312, %v315
    %v318 = vmul.u32 %v313, %v314
    %v319 = vmul.u32 %v313, %v315
    %v320 = vshll.u32 %v317, 16
    %v321 = vshrl.u32 %v317, 16
    %v322 = vshll.u32 %v318, 16
    %v323 = vshrl.u32 %v318, 16
    %vm324 = vc.u32 %v316, %v320
    %v325 = vsel %vm324, 1, 0
    %v326 = vadd.s32 %v316, %v320
    %v327 = vadd.s32 %v319, %v325
    %vm328 = vc.u32 %v326, %v322
    %v329 = vsel %vm328, 1, 0
    %v330 = vadd.s32 %v326, %v322
    %v331 = vadd.s32 %v327, %v329
    %v332 = vadd.s32 %v331, %v321
    %v333 = vadd.s32 %v332, %v323
    %v334 = vmul.u32 %v289, %v280
    %v335 = vadd.s32 %v311, %v330
    %vm336 = vc.u32 %v311, %v330
    %v337 = vadd.s32 %v333, 1
    %v338 = vsel %vm336, %v337, %v333
    %v339 = vadd.s32 %v334, %v338
    %v340 = vadd.s32 %v339, 536870912
    %v341 = vshrl.u32 %v340, 30
    %v342 = vshll.u32 %v341, 30
    %v343 = vsub.s32 %v339, %v342
    %vm344 = vcmp.lt.s32.totalorder %v343, 0
    %v345 = vsub.s32 0, %v343
    %v346 = vsel %vm344, %v345, %v343
    %v347 = vclz %v346
    %v348 = vsub.s32 %v347, 2
    %vm349 = vcmp.gt.s32.totalorder 0, %v348
    %v350 = vsel %vm349, 0, %v348
    %v351 = vsub.s32 32, %v350
    %v352 = vshll.u32 %v343, %v350
    %v353 = vshrl.u32 %v335, %v351
    %v354 = vor.u32 %v352, %v353
    %v355 = vsub.s32 4294967266, %v350
    %v356 = vadd.s32 %v355, 127
    %v357 = vshll.u32 %v356, 23
    %v358 = vor.u32 4788187, %v357
    %v359 = vand.u32 2147483647, %v358
    %v361 = vcvt.s32.f32 %v354
    %v362 = vmul.f32 %v361, %v359
    %v363 = vxor.u32 %v362, 2147483648
    %v364 = vsel %vm243, %v363, %v362
    %v365 = vsub.s32 4, %v341
    %v366 = vsel %vm243, %v365, %v341
    %v367 = vsel %vm242, %v83, %v364
    %v368 = vsel %vm242, 0, %v366
    %v369 = vmul.f32 %v367, %v367
    %v370 = vmul.f32 %v369, -0.001358992
    %v371 = vadd.f32 %v370, 0.041655596
    %v372 = vmul.f32 %v369, %v371
    %v373 = vadd.f32 %v372, -0.4999988
    %v374 = vmul.f32 %v369, %v373
    %v375 = vadd.f32 1.0, %v374
    %v376 = vmul.f32 %v367, %v367
    %v377 = vmul.f32 %v376, -0.00019511016
    %v378 = vadd.f32 %v377, 0.008332121
    %v379 = vmul.f32 %v376, %v378
    %v380 = vadd.f32 %v379, -0.16666654
    %v381 = vmul.f32 %v376, %v380
    %v382 = vadd.f32 %v381, 1.0
    %v383 = vmul.f32 %v382, %v367
    %vm384 = vweird.f32 %v83
    %v385 = vadd.s32 %v368, 3
    %v386 = vand.u32 %v385, 3
    %vm387 = vcmp.lt.s32.totalorder %v386, 2
    %vm388 = vcmp.eq.s32.totalorder %v386, 0
    %v389 = vxor.u32 %v383, 2147483648
    %v390 = vsel %vm388, %v375, %v389
    %vm391 = vcmp.eq.s32.totalorder %v386, 2
    %v392 = vxor.u32 %v375, 2147483648
    %v393 = vsel %vm391, %v392, %v383
    %v394 = vsel %vm387, %v390, %v393
    %v395 = vsel %vm384, nan, %v394
    %v396 = vand.u32 2147483647, %v84
    %vm397 = vcmp.le.f32.partialorder %v396, 0.7853982
    %vm398 = vcmp.lt.s32.totalorder %v84, 0
    %v399 = vand.u32 %v84, 2139095040
    %v400 = vshrl.u32 %v399, 23
    %v401 = vsub.s32 %v400, 127
    %v402 = vand.u32 2147483647, %v84
    %v403 = vand.u32 %v402, 8388607
    %v404 = vor.u32 %v403, 8388608
    %v405 = vsub.s32 0, %v404
    %v406 = vadd.s32 %v401, 1
    %vm407 = vcmp.gt.s32.totalorder %v406, 0
    %v408 = vsel %vm407, %v406, 0
    %v409 = vshrl.u32 %v408, 5
    %v410 = vand.u32 %v408, 31
    %v411 = vsub.s32 32, %v410
    %v412 = vshrl.u32 683565275, %v411
    %v413 = vshll.u32 683565275, %v410
    %v414 = vshrl.u32 2475754826, %v411
    %v415 = vor.u32 %v413, %v414
    %v416 = vshll.u32 2475754826, %v410
    %v417 = vshrl.u32 2131351028, %v411
    %v418 = vor.u32 %v416, %v417
    %v419 = vshll.u32 2131351028, %v410
    %v420 = vshrl.u32 2102212464, %v411
    %v421 = vor.u32 %v419, %v420
    %v422 = vshll.u32 2102212464, %v410
    %v423 = vshrl.u32 920167782, %v411
    %v424 = vor.u32 %v422, %v423
    %v425 = vshll.u32 920167782, %v410
    %v426 = vshrl.u32 1326507024, %v411
    %v427 = vor.u32 %v425, %v426
    %vm428 = vcmp.lt.s32.totalorder %v409, 1
    %vm429 = vcmp.lt.s32.totalorder %v409, 2
    %vm430 = vcmp.lt.s32.totalorder %v409, 3
    %vm431 = vcmp.lt.s32.totalorder %v409, 4
    %v432 = vsel %vm428, %v412, %v415
    %v433 = vsel %vm431, %v421, 2102212464
    %v434 = vsel %vm430, %v418, %v433
    %v435 = vsel %vm429, %v432, %v434
    %v436 = vsel %vm428, %v415, %v418
    %v437 = vsel %vm431, %v424, 920167782
    %v438 = vsel %vm430, %v421, %v437
    %v439 = vsel %vm429, %v436, %v438
    %v440 = vsel %vm428, %v418, %v421
    %v441 = vsel %vm431, %v427, 1326507024
    %v442 = vsel %vm430, %v424, %v441
    %v443 = vsel %vm429, %v440, %v442
    %v444 = vshll.u32 %v404, 8
    %v445 = vand.u32 %v444, 65535
    %v446 = vshrl.u32 %v444, 16
    %v447 = vand.u32 %v443, 65535
    %v448 = vshrl.u32 %v443, 16
    %v449 = vmul.u32 %v445, %v447
    %v450 = vmul.u32 %v445, %v448
    %v451 = vmul.u32 %v446, %v447
    %v452 = vmul.u32 %v446, %v448
    %v453 = vshll.u32 %v450, 16
    %v454 = vshrl.u32 %v450, 16
    %v455 = vshll.u32 %v451, 16
    %v456 = vshrl.u32 %v451, 16
    %vm457 = vc.u32 %v449, %v453
    %v458 = vsel %vm457, 1, 0
    %v459 = vadd.s32 %v449, %v453
    %v460 = vadd.s32 %v452, %v458
    %vm461 = vc.u32 %v459, %v455
    %v462 = vsel %vm461, 1, 0
    %v463 = vadd.s32 %v459, %v455
    %v464 = vadd.s32 %v460, %v462
    %v465 = vadd.s32 %v464, %v454
    %v466 = vadd.s32 %v465, %v456
    %v467 = vand.u32 %v444, 65535
    %v468 = vshrl.u32 %v444, 16
    %v469 = vand.u32 %v439, 65535
    %v470 = vshrl.u32 %v439, 16
    %v471 = vmul.u32 %v467, %v469
    %v472 = vmul.u32 %v467, %v470
    %v473 = vmul.u32 %v468, %v469
    %v474 = vmul.u32 %v468, %v470
    %v475 = vshll.u32 %v472, 16
    %v476 = vshrl.u32 %v472, 16
    %v477 = vshll.u32 %v473, 16
    %v478 = vshrl.u32 %v473, 16
    %vm479 = vc.u32 %v471, %v475
    %v480 = vsel %vm479, 1, 0
    %v481 = vadd.s32 %v471, %v475
    %v482 = vadd.s32 %v474, %v480
    %vm483 = vc.u32 %v481, %v477
    %v484 = vsel %vm483, 1, 0
    %v485 = vadd.s32 %v481, %v477
    %v486 = vadd.s32 %v482, %v484
    %v487 = vadd.s32 %v486, %v476
    %v488 = vadd.s32 %v487, %v478
    %v489 = vmul.u32 %v444, %v435
    %v490 = vadd.s32 %v466, %v485
    %vm491 = vc.u32 %v466, %v485
    %v492 = vadd.s32 %v488, 1
    %v493 = vsel %vm491, %v492, %v488
    %v494 = vadd.s32 %v489, %v493
    %v495 = vadd.s32 %v494, 536870912
    %v496 = vshrl.u32 %v495, 30
    %v497 = vshll.u32 %v496, 30
    %v498 = vsub.s32 %v494, %v497
    %vm499 = vcmp.lt.s32.totalorder %v498, 0
    %v500 = vsub.s32 0, %v498
    %v501 = vsel %vm499, %v500, %v498
    %v502 = vclz %v501
    %v503 = vsub.s32 %v502, 2
    %vm504 = vcmp.gt.s32.totalorder 0, %v503
    %v505 = vsel %vm504, 0, %v503
    %v506 = vsub.s32 32, %v505
    %v507 = vshll.u32 %v498, %v505
    %v508 = vshrl.u32 %v490, %v506
    %v509 = vor.u32 %v507, %v508
    %v510 = vsub.s32 4294967266, %v505
    %v511 = vadd.s32 %v510, 127
    %v512 = vshll.u32 %v511, 23
    %v513 = vor.u32 4788187, %v512
    %v514 = vand.u32 2147483647, %v513
    %v516 = vcvt.s32.f32 %v509
    %v517 = vmul.f32 %v516, %v514
    %v518 = vxor.u32 %v517, 2147483648
    %v519 = vsel %vm398, %v518, %v517
    %v520 = vsub.s32 4, %v496
    %v521 = vsel %vm398, %v520, %v496
    %v522 = vsel %vm397, %v84, %v519
    %v523 = vsel %vm397, 0, %v521
    %v524 = vmul.f32 %v522, %v522
    %v525 = vmul.f32 %v524, -0.001358992
    %v526 = vadd.f32 %v525, 0.041655596
    %v527 = vmul.f32 %v524, %v526
    %v528 = vadd.f32 %v527, -0.4999988
    %v529 = vmul.f32 %v524, %v528
    %v530 = vadd.f32 1.0, %v529
    %v531 = vmul.f32 %v522, %v522
    %v532 = vmul.f32 %v531, -0.00019511016
    %v533 = vadd.f32 %v532, 0.008332121
    %v534 = vmul.f32 %v531, %v533
    %v535 = vadd.f32 %v534, -0.16666654
    %v536 = vmul.f32 %v531, %v535
    %v537 = vadd.f32 %v536, 1.0
    %v538 = vmul.f32 %v537, %v522
    %vm539 = vweird.f32 %v84
    %v540 = vadd.s32 %v523, 3
    %v541 = vand.u32 %v540, 3
    %vm542 = vcmp.lt.s32.totalorder %v541, 2
    %vm543 = vcmp.eq.s32.totalorder %v541, 0
    %v544 = vxor.u32 %v538, 2147483648
    %v545 = vsel %vm543, %v530, %v544
    %vm546 = vcmp.eq.s32.totalorder %v541, 2
    %v547 = vxor.u32 %v530, 2147483648
    %v548 = vsel %vm546, %v547, %v538
    %v549 = vsel %vm542, %v545, %v548
    %v550 = vsel %vm539, nan, %v549
    %v551 = vand.u32 2147483647, %v85
    %vm552 = vcmp.le.f32.partialorder %v551, 0.7853982
    %vm553 = vcmp.lt.s32.totalorder %v85, 0
    %v554 = vand.u32 %v85, 2139095040
    %v555 = vshrl.u32 %v554, 23
    %v556 = vsub.s32 %v555, 127
    %v557 = vand.u32 2147483647, %v85
    %v558 = vand.u32 %v557, 8388607
    %v559 = vor.u32 %v558, 8388608
    %v560 = vsub.s32 0, %v559
    %v561 = vadd.s32 %v556, 1
    %vm562 = vcmp.gt.s32.totalorder %v561, 0
    %v563 = vsel %vm562, %v561, 0
    %v564 = vshrl.u32 %v563, 5
    %v565 = vand.u32 %v563, 31
    %v566 = vsub.s32 32, %v565
    %v567 = vshrl.u32 683565275, %v566
    %v568 = vshll.u32 683565275, %v565
    %v569 = vshrl.u32 2475754826, %v566
    %v570 = vor.u32 %v568, %v569
    %v571 = vshll.u32 2475754826, %v565
    %v572 = vshrl.u32 2131351028, %v566
    %v573 = vor.u32 %v571, %v572
    %v574 = vshll.u32 2131351028, %v565
    %v575 = vshrl.u32 2102212464, %v566
    %v576 = vor.u32 %v574, %v575
    %v577 = vshll.u32 2102212464, %v565
    %v578 = vshrl.u32 920167782, %v566
    %v579 = vor.u32 %v577, %v578
    %v580 = vshll.u32 920167782, %v565
    %v581 = vshrl.u32 1326507024, %v566
    %v582 = vor.u32 %v580, %v581
    %vm583 = vcmp.lt.s32.totalorder %v564, 1
    %vm584 = vcmp.lt.s32.totalorder %v564, 2
    %vm585 = vcmp.lt.s32.totalorder %v564, 3
    %vm586 = vcmp.lt.s32.totalorder %v564, 4
    %v587 = vsel %vm583, %v567, %v570
    %v588 = vsel %vm586, %v576, 2102212464
    %v589 = vsel %vm585, %v573, %v588
    %v590 = vsel %vm584, %v587, %v589
    %v591 = vsel %vm583, %v570, %v573
    %v592 = vsel %vm586, %v579, 920167782
    %v593 = vsel %vm585, %v576, %v592
    %v594 = vsel %vm584, %v591, %v593
    %v595 = vsel %vm583, %v573, %v576
    %v596 = vsel %vm586, %v582, 1326507024
    %v597 = vsel %vm585, %v579, %v596
    %v598 = vsel %vm584, %v595, %v597
    %v599 = vshll.u32 %v559, 8
    %v600 = vand.u32 %v599, 65535
    %v601 = vshrl.u32 %v599, 16
    %v602 = vand.u32 %v598, 65535
    %v603 = vshrl.u32 %v598, 16
    %v604 = vmul.u32 %v600, %v602
    %v605 = vmul.u32 %v600, %v603
    %v606 = vmul.u32 %v601, %v602
    %v607 = vmul.u32 %v601, %v603
    %v608 = vshll.u32 %v605, 16
    %v609 = vshrl.u32 %v605, 16
    %v610 = vshll.u32 %v606, 16
    %v611 = vshrl.u32 %v606, 16
    %vm612 = vc.u32 %v604, %v608
    %v613 = vsel %vm612, 1, 0
    %v614 = vadd.s32 %v604, %v608
    %v615 = vadd.s32 %v607, %v613
    %vm616 = vc.u32 %v614, %v610
    %v617 = vsel %vm616, 1, 0
    %v618 = vadd.s32 %v614, %v610
    %v619 = vadd.s32 %v615, %v617
    %v620 = vadd.s32 %v619, %v609
    %v621 = vadd.s32 %v620, %v611
    %v622 = vand.u32 %v599, 65535
    %v623 = vshrl.u32 %v599, 16
    %v624 = vand.u32 %v594, 65535
    %v625 = vshrl.u32 %v594, 16
    %v626 = vmul.u32 %v622, %v624
    %v627 = vmul.u32 %v622, %v625
    %v628 = vmul.u32 %v623, %v624
    %v629 = vmul.u32 %v623, %v625
    %v630 = vshll.u32 %v627, 16
    %v631 = vshrl.u32 %v627, 16
    %v632 = vshll.u32 %v628, 16
    %v633 = vshrl.u32 %v628, 16
    %vm634 = vc.u32 %v626, %v630
    %v635 = vsel %vm634, 1, 0
    %v636 = vadd.s32 %v626, %v630
    %v637 = vadd.s32 %v629, %v635
    %vm638 = vc.u32 %v636, %v632
    %v639 = vsel %vm638, 1, 0
    %v640 = vadd.s32 %v636, %v632
    %v641 = vadd.s32 %v637, %v639
    %v642 = vadd.s32 %v641, %v631
    %v643 = vadd.s32 %v642, %v633
    %v644 = vmul.u32 %v599, %v590
    %v645 = vadd.s32 %v621, %v640
    %vm646 = vc.u32 %v621, %v640
    %v647 = vadd.s32 %v643, 1
    %v648 = vsel %vm646, %v647, %v643
    %v649 = vadd.s32 %v644, %v648
    %v650 = vadd.s32 %v649, 536870912
    %v651 = vshrl.u32 %v650, 30
    %v652 = vshll.u32 %v651, 30
    %v653 = vsub.s32 %v649, %v652
    %vm654 = vcmp.lt.s32.totalorder %v653, 0
    %v655 = vsub.s32 0, %v653
    %v656 = vsel %vm654, %v655, %v653
    %v657 = vclz %v656
    %v658 = vsub.s32 %v657, 2
    %vm659 = vcmp.gt.s32.totalorder 0, %v658
    %v660 = vsel %vm659, 0, %v658
    %v661 = vsub.s32 32, %v660
    %v662 = vshll.u32 %v653, %v660
    %v663 = vshrl.u32 %v645, %v661
    %v664 = vor.u32 %v662, %v663
    %v665 = vsub.s32 4294967266, %v660
    %v666 = vadd.s32 %v665, 127
    %v667 = vshll.u32 %v666, 23
    %v668 = vor.u32 4788187, %v667
    %v669 = vand.u32 2147483647, %v668
    %v671 = vcvt.s32.f32 %v664
    %v672 = vmul.f32 %v671, %v669
    %v673 = vxor.u32 %v672, 2147483648
    %v674 = vsel %vm553, %v673, %v672
    %v675 = vsub.s32 4, %v651
    %v676 = vsel %vm553, %v675, %v651
    %v677 = vsel %vm552, %v85, %v674
    %v678 = vsel %vm552, 0, %v676
    %v679 = vmul.f32 %v677, %v677
    %v680 = vmul.f32 %v679, -0.001358992
    %v681 = vadd.f32 %v680, 0.041655596
    %v682 = vmul.f32 %v679, %v681
    %v683 = vadd.f32 %v682, -0.4999988
    %v684 = vmul.f32 %v679, %v683
    %v685 = vadd.f32 1.0, %v684
    %v686 = vmul.f32 %v677, %v677
    %v687 = vmul.f32 %v686, -0.00019511016
    %v688 = vadd.f32 %v687, 0.008332121
    %v689 = vmul.f32 %v686, %v688
    %v690 = vadd.f32 %v689, -0.16666654
    %v691 = vmul.f32 %v686, %v690
    %v692 = vadd.f32 %v691, 1.0
    %v693 = vmul.f32 %v692, %v677
    %vm694 = vweird.f32 %v85
    %v695 = vadd.s32 %v678, 3
    %v696 = vand.u32 %v695, 3
    %vm697 = vcmp.lt.s32.totalorder %v696, 2
    %vm698 = vcmp.eq.s32.totalorder %v696, 0
    %v699 = vxor.u32 %v693, 2147483648
    %v700 = vsel %vm698, %v685, %v699
    %vm701 = vcmp.eq.s32.totalorder %v696, 2
    %v702 = vxor.u32 %v685, 2147483648
    %v703 = vsel %vm701, %v702, %v693
    %v704 = vsel %vm697, %v700, %v703
    %v705 = vsel %vm694, nan, %v704
    %707 = vset.pattern.permute.xlu0 0
    %708 = vperm.xlu0 %707, %v52
    %v709 = vpop.permute.xlu0 %708
    %712 = vset.pattern.permute.xlu0 0
    %713 = vperm.xlu0 %712, %v53
    %v714 = vpop.permute.xlu0 %713
    %717 = vset.pattern.permute.xlu0 0
    %718 = vperm.xlu0 %717, %v54
    %v719 = vpop.permute.xlu0 %718
    %722 = vset.pattern.permute.xlu0 0
    %723 = vperm.xlu0 %722, %v55
    %v724 = vpop.permute.xlu0 %723
    %v726 = vmul.f32 %v240, %v709
    %v727 = vmul.f32 %v395, %v714
    %v728 = vmul.f32 %v550, %v719
    %v729 = vmul.f32 %v705, %v724
    %vm730 = vcmp.eq.s32.totalorder %v40, 1
    %vm731 = vcmp.eq.s32.totalorder %v41, 1
    %vm732 = vcmp.eq.s32.totalorder %v42, 1
    %vm733 = vcmp.eq.s32.totalorder %v43, 1
    %v734 = vsel %vm730, 1, 0
    %v735 = vsel %vm731, 1, 0
    %v736 = vsel %vm732, 1, 0
    %v737 = vsel %vm733, 1, 0
    %v738 = vcvt.s32.f32 %v734
    %v739 = vcvt.s32.f32 %v735
    %v740 = vcvt.s32.f32 %v736
    %v741 = vcvt.s32.f32 %v737
    %743 = vset.pattern.permute.xlu0 0
    %744 = vperm.xlu0 %743, %v738
    %v745 = vpop.permute.xlu0 %744
    %748 = vset.pattern.permute.xlu0 0
    %749 = vperm.xlu0 %748, %v739
    %v750 = vpop.permute.xlu0 %749
    %753 = vset.pattern.permute.xlu0 0
    %754 = vperm.xlu0 %753, %v740
    %v755 = vpop.permute.xlu0 %754
    %758 = vset.pattern.permute.xlu0 0
    %759 = vperm.xlu0 %758, %v741
    %v760 = vpop.permute.xlu0 %759
    %v762 = vperm.slane %v34, 1
    %v763 = vmul.f32 %v745, %v762
    %v764 = vmul.f32 %v750, %v762
    %v765 = vmul.f32 %v755, %v762
    %v766 = vmul.f32 %v760, %v762
    %v767 = vadd.f32 %v726, %v763
    %v768 = vadd.f32 %v727, %v764
    %v769 = vadd.f32 %v728, %v765
    %v770 = vadd.f32 %v729, %v766
    %vm771 = vcmp.eq.s32.totalorder %v40, 2
    %vm772 = vcmp.eq.s32.totalorder %v41, 2
    %vm773 = vcmp.eq.s32.totalorder %v42, 2
    %vm774 = vcmp.eq.s32.totalorder %v43, 2
    %v775 = vsel %vm771, 1, 0
    %v776 = vsel %vm772, 1, 0
    %v777 = vsel %vm773, 1, 0
    %v778 = vsel %vm774, 1, 0
    %v779 = vcvt.s32.f32 %v775
    %v780 = vcvt.s32.f32 %v776
    %v781 = vcvt.s32.f32 %v777
    %v782 = vcvt.s32.f32 %v778
    %784 = vset.pattern.permute.xlu0 0
    %785 = vperm.xlu0 %784, %v779
    %v786 = vpop.permute.xlu0 %785
    %789 = vset.pattern.permute.xlu0 0
    %790 = vperm.xlu0 %789, %v780
    %v791 = vpop.permute.xlu0 %790
    %794 = vset.pattern.permute.xlu0 0
    %795 = vperm.xlu0 %794, %v781
    %v796 = vpop.permute.xlu0 %795
    %799 = vset.pattern.permute.xlu0 0
    %800 = vperm.xlu0 %799, %v782
    %v801 = vpop.permute.xlu0 %800
    %v803 = vperm.slane %v34, 2
    %v804 = vmul.f32 %v786, %v803
    %v805 = vmul.f32 %v791, %v803
    %v806 = vmul.f32 %v796, %v803
    %v807 = vmul.f32 %v801, %v803
    %v808 = vadd.f32 %v767, %v804
    %v809 = vadd.f32 %v768, %v805
    %v810 = vadd.f32 %v769, %v806
    %v811 = vadd.f32 %v770, %v807
    %vm812 = vcmp.eq.s32.totalorder %v40, 3
    %vm813 = vcmp.eq.s32.totalorder %v41, 3
    %vm814 = vcmp.eq.s32.totalorder %v42, 3
    %vm815 = vcmp.eq.s32.totalorder %v43, 3
    %v816 = vsel %vm812, 1, 0
    %v817 = vsel %vm813, 1, 0
    %v818 = vsel %vm814, 1, 0
    %v819 = vsel %vm815, 1, 0
    %v820 = vcvt.s32.f32 %v816
    %v821 = vcvt.s32.f32 %v817
    %v822 = vcvt.s32.f32 %v818
    %v823 = vcvt.s32.f32 %v819
    %825 = vset.pattern.permute.xlu0 0
    %826 = vperm.xlu0 %825, %v820
    %v827 = vpop.permute.xlu0 %826
    %830 = vset.pattern.permute.xlu0 0
    %831 = vperm.xlu0 %830, %v821
    %v832 = vpop.permute.xlu0 %831
    %835 = vset.pattern.permute.xlu0 0
    %836 = vperm.xlu0 %835, %v822
    %v837 = vpop.permute.xlu0 %836
    %840 = vset.pattern.permute.xlu0 0
    %841 = vperm.xlu0 %840, %v823
    %v842 = vpop.permute.xlu0 %841
    %v844 = vperm.slane %v34, 3
    %v845 = vmul.f32 %v827, %v844
    %v846 = vmul.f32 %v832, %v844
    %v847 = vmul.f32 %v837, %v844
    %v848 = vmul.f32 %v842, %v844
    %v849 = vadd.f32 %v808, %v845
    %v850 = vadd.f32 %v809, %v846
    %v851 = vadd.f32 %v810, %v847
    %v852 = vadd.f32 %v811, %v848
    %vm853 = vcmp.eq.s32.totalorder %v40, 4
    %vm854 = vcmp.eq.s32.totalorder %v41, 4
    %vm855 = vcmp.eq.s32.totalorder %v42, 4
    %vm856 = vcmp.eq.s32.totalorder %v43, 4
    %v857 = vsel %vm853, 1, 0
    %v858 = vsel %vm854, 1, 0
    %v859 = vsel %vm855, 1, 0
    %v860 = vsel %vm856, 1, 0
    %v861 = vcvt.s32.f32 %v857
    %v862 = vcvt.s32.f32 %v858
    %v863 = vcvt.s32.f32 %v859
    %v864 = vcvt.s32.f32 %v860
    %866 = vset.pattern.permute.xlu0 0
    %867 = vperm.xlu0 %866, %v861
    %v868 = vpop.permute.xlu0 %867
    %871 = vset.pattern.permute.xlu0 0
    %872 = vperm.xlu0 %871, %v862
    %v873 = vpop.permute.xlu0 %872
    %876 = vset.pattern.permute.xlu0 0
    %877 = vperm.xlu0 %876, %v863
    %v878 = vpop.permute.xlu0 %877
    %881 = vset.pattern.permute.xlu0 0
    %882 = vperm.xlu0 %881, %v864
    %v883 = vpop.permute.xlu0 %882
    %v885 = vperm.slane %v34, 4
    %v886 = vmul.f32 %v868, %v885
    %v887 = vmul.f32 %v873, %v885
    %v888 = vmul.f32 %v878, %v885
    %v889 = vmul.f32 %v883, %v885
    %v890 = vadd.f32 %v849, %v886
    %v891 = vadd.f32 %v850, %v887
    %v892 = vadd.f32 %v851, %v888
    %v893 = vadd.f32 %v852, %v889
    %vm894 = vcmp.eq.s32.totalorder %v40, 5
    %vm895 = vcmp.eq.s32.totalorder %v41, 5
    %vm896 = vcmp.eq.s32.totalorder %v42, 5
    %vm897 = vcmp.eq.s32.totalorder %v43, 5
    %v898 = vsel %vm894, 1, 0
    %v899 = vsel %vm895, 1, 0
    %v900 = vsel %vm896, 1, 0
    %v901 = vsel %vm897, 1, 0
    %v902 = vcvt.s32.f32 %v898
    %v903 = vcvt.s32.f32 %v899
    %v904 = vcvt.s32.f32 %v900
    %v905 = vcvt.s32.f32 %v901
    %907 = vset.pattern.permute.xlu0 0
    %908 = vperm.xlu0 %907, %v902
    %v909 = vpop.permute.xlu0 %908
    %912 = vset.pattern.permute.xlu0 0
    %913 = vperm.xlu0 %912, %v903
    %v914 = vpop.permute.xlu0 %913
    %917 = vset.pattern.permute.xlu0 0
    %918 = vperm.xlu0 %917, %v904
    %v919 = vpop.permute.xlu0 %918
    %922 = vset.pattern.permute.xlu0 0
    %923 = vperm.xlu0 %922, %v905
    %v924 = vpop.permute.xlu0 %923
    %v926 = vperm.slane %v34, 5
    %v927 = vmul.f32 %v909, %v926
    %v928 = vmul.f32 %v914, %v926
    %v929 = vmul.f32 %v919, %v926
    %v930 = vmul.f32 %v924, %v926
    %v931 = vadd.f32 %v890, %v927
    %v932 = vadd.f32 %v891, %v928
    %v933 = vadd.f32 %v892, %v929
    %v934 = vadd.f32 %v893, %v930
    %v935 = vlaneseq
    %v936 = vshrl.u32 %v935, 7
    %v937 = vadd.s32 %v936, 8
    %v938 = vadd.s32 %v936, 16
    %v939 = vadd.s32 %v936, 24
    %vm940 = vcmp.lt.s32.totalorder %v936, 0
    %v941 = vsub.s32 0, %v936
    %v942 = vsel %vm940, %v941, %v936
    %v943 = vshrl.u32 %v942, 4
    %v944 = vand.u32 %v942, 15
    %v945 = vsub.s32 0, %v944
    %v946 = vsel %vm940, %v945, %v944
    %vm947 = vcmp.lt.s32.totalorder %v937, 0
    %v948 = vsub.s32 0, %v937
    %v949 = vsel %vm947, %v948, %v937
    %v950 = vshrl.u32 %v949, 4
    %v951 = vand.u32 %v949, 15
    %v952 = vsub.s32 0, %v951
    %v953 = vsel %vm947, %v952, %v951
    %vm954 = vcmp.lt.s32.totalorder %v938, 0
    %v955 = vsub.s32 0, %v938
    %v956 = vsel %vm954, %v955, %v938
    %v957 = vshrl.u32 %v956, 4
    %v958 = vand.u32 %v956, 15
    %v959 = vsub.s32 0, %v958
    %v960 = vsel %vm954, %v959, %v958
    %vm961 = vcmp.lt.s32.totalorder %v939, 0
    %v962 = vsub.s32 0, %v939
    %v963 = vsel %vm961, %v962, %v939
    %v964 = vshrl.u32 %v963, 4
    %v965 = vand.u32 %v963, 15
    %v966 = vsub.s32 0, %v965
    %v967 = vsel %vm961, %v966, %v965
    %vm968 = vcmp.ne.s32.totalorder %v946, 0
    %vm969 = vcmp.ne.s32.totalorder %v953, 0
    %vm970 = vcmp.ne.s32.totalorder %v960, 0
    %vm971 = vcmp.ne.s32.totalorder %v967, 0
    %vm972 = vcmp.lt.s32.totalorder %v946, 0
    %vm973 = vcmp.lt.s32.totalorder %v953, 0
    %vm974 = vcmp.lt.s32.totalorder %v960, 0
    %vm975 = vcmp.lt.s32.totalorder %v967, 0
    %vm976 = vmand %vm972, %vm968
    %vm977 = vmand %vm973, %vm969
    %vm978 = vmand %vm974, %vm970
    %vm979 = vmand %vm975, %vm971
    %v980 = vadd.s32 %v946, 16
    %v981 = vadd.s32 %v953, 16
    %v982 = vadd.s32 %v960, 16
    %v983 = vadd.s32 %v967, 16
    %v984 = vsel %vm976, %v980, %v946
    %v985 = vsel %vm977, %v981, %v953
    %v986 = vsel %vm978, %v982, %v960
    %v987 = vsel %vm979, %v983, %v967
    %v988 = vlaneseq
    %v989 = vand.u32 %v988, 127
    %v990 = vld [vmem:[#allocation2] sm:$0xf]
    %v991 = vld [vmem:[#allocation2 + $0x4] sm:$0xf]
    %v992 = vld [vmem:[#allocation2 + $0x8] sm:$0xf]
    %v993 = vld [vmem:[#allocation2 + $0xc] sm:$0xf]
    %v994 = vld [vmem:[#allocation2 + $0x10] sm:$0xf]
    %v995 = vld [vmem:[#allocation2 + $0x14] sm:$0xf]
    %v996 = vld [vmem:[#allocation2 + $0x18] sm:$0xf]
    %v997 = vld [vmem:[#allocation2 + $0x1c] sm:$0xf]
    %v998 = vld [vmem:[#allocation2 + $0x20] sm:$0xf]
    %v999 = vld [vmem:[#allocation2 + $0x24] sm:$0xf]
    %v1000 = vld [vmem:[#allocation2 + $0x28] sm:$0xf]
    %v1001 = vld [vmem:[#allocation2 + $0x2c] sm:$0xf]
    %v1002 = vld [vmem:[#allocation2 + $0x30] sm:$0xf]
    %v1003 = vld [vmem:[#allocation2 + $0x34] sm:$0xf]
    %v1004 = vld [vmem:[#allocation2 + $0x38] sm:$0xf]
    %v1005 = vld [vmem:[#allocation2 + $0x3c] sm:$0xf]
    %v1006 = vrot.slane %v931, 7
    %v1007 = vrot.slane %v932, 7
    %v1008 = vrot.slane %v933, 7
    %v1009 = vrot.slane %v934, 7
    %vm1010 = vcmp.lt.s32.totalorder %v936, 1
    %v1011 = vsel %vm1010, %v1008, %v1009
    %v1012 = vsel %vm1010, %v1007, %v1008
    %v1013 = vsel %vm1010, %v1006, %v1007
    %v1014 = vsel %vm1010, %v1009, %v1006
    %vm1015 = vcmp.ge.s32.totalorder %v984, 1
    %vm1016 = vcmp.ge.s32.totalorder %v985, 1
    %vm1017 = vcmp.ge.s32.totalorder %v986, 1
    %vm1018 = vcmp.ge.s32.totalorder %v987, 1
    %v1019 = vsel %vm1015, %v1014, 0.0
    %v1020 = vsel %vm1016, %v1013, 0.0
    %v1021 = vsel %vm1017, %v1012, 0.0
    %v1022 = vsel %vm1018, %v1011, 0.0
    %1023 = vrot.lane.b32.xlu0 %v931, 32
    %v1024 = vpop.permute.xlu0 %1023
    %1025 = vrot.lane.b32.xlu0 %v932, 32
    %v1026 = vpop.permute.xlu0 %1025
    %1027 = vrot.lane.b32.xlu0 %v933, 32
    %v1028 = vpop.permute.xlu0 %1027
    %1029 = vrot.lane.b32.xlu0 %v934, 32
    %v1030 = vpop.permute.xlu0 %1029
    %v1031 = vadd.f32 %v1019, %v1024
    %v1032 = vadd.f32 %v1020, %v1026
    %v1033 = vadd.f32 %v1021, %v1028
    %v1034 = vadd.f32 %v1022, %v1030
    %v1035 = vpack.c.bf16 %v1032, %v1031
    %v1036 = vpack.c.bf16 %v1034, %v1033
    %v1053 = vunpack.c.l.b16 %v990
    %v1054 = vunpack.c.l.b16 %v991
    %v1055 = vunpack.c.l.b16 %v992
    %v1056 = vunpack.c.l.b16 %v993
    %v1057 = vunpack.c.l.b16 %v994
    %v1058 = vunpack.c.l.b16 %v995
    %v1059 = vunpack.c.l.b16 %v996
    %v1060 = vunpack.c.l.b16 %v997
    %v1061 = vunpack.c.l.b16 %v998
    %v1062 = vunpack.c.l.b16 %v999
    %v1063 = vunpack.c.l.b16 %v1000
    %v1064 = vunpack.c.l.b16 %v1001
    %v1065 = vunpack.c.l.b16 %v1002
    %v1066 = vunpack.c.l.b16 %v1003
    %v1067 = vunpack.c.l.b16 %v1004
    %v1068 = vunpack.c.l.b16 %v1005
    %v1069 = vpack.c.b16 %v1054, %v1053
    %v1070 = vpack.c.b16 %v1056, %v1055
    %v1071 = vpack.c.b16 %v1058, %v1057
    %v1072 = vpack.c.b16 %v1060, %v1059
    %v1073 = vpack.c.b16 %v1062, %v1061
    %v1074 = vpack.c.b16 %v1064, %v1063
    %v1075 = vpack.c.b16 %v1066, %v1065
    %v1076 = vpack.c.b16 %v1068, %v1067
    %1085 = vmatpush.bf16.msra.mxu0 %v1076
    %1086 = vmatpush.bf16.msra.mxu0 %v1075
    %1087 = vmatpush.bf16.msra.mxu0 %v1074
    %1088 = vmatpush.bf16.msra.mxu0 %v1073
    %1089 = vmatpush.bf16.msra.mxu0 %v1072
    %1090 = vmatpush.bf16.msra.mxu0 %v1071
    %1091 = vmatpush.bf16.msra.mxu0 %v1070
    %1092 = vmatpush.bf16.msra.mxu0 %v1069
    %1093 = vmatmul.bf16.gmra.mxu0 %v1035
    %v1094 = vpop.f32.mrf.mxu0
    %v1095 = vadd.f32 0.0, %v1094
    %v1096 = vpop.f32.mrf.mxu0
    %v1097 = vadd.f32 0.0, %v1096
    %1098 = vmatmul.bf16.gmra.mxu0 %v1036
    %v1099 = vpop.f32.mrf.mxu0
    %v1100 = vadd.f32 0.0, %v1099
    %v1101 = vpop.f32.mrf.mxu0
    %v1102 = vadd.f32 0.0, %v1101
    %1103 = vdwg.mxu0
    %1104 = vrot.lane.b32.xlu0 %v1095, 96
    %v1105 = vpop.permute.xlu0 %1104
    %1106 = vrot.lane.b32.xlu0 %v1097, 96
    %v1107 = vpop.permute.xlu0 %1106
    %1108 = vrot.lane.b32.xlu0 %v1100, 96
    %v1109 = vpop.permute.xlu0 %1108
    %1110 = vrot.lane.b32.xlu0 %v1102, 96
    %v1111 = vpop.permute.xlu0 %1110
    %v1112 = vperm.slane %v34, 6
    %v1113 = vadd.f32 %v1095, %v1112
    %v1114 = vadd.f32 %v1097, %v1112
    %v1115 = vadd.f32 %v1100, %v1112
    %v1116 = vadd.f32 %v1102, %v1112
    %vm1117 = vcmp.ge.f32.partialorder %v1113, 0.0
    %vm1118 = vcmp.ge.f32.partialorder %v1114, 0.0
    %vm1119 = vcmp.ge.f32.partialorder %v1115, 0.0
    %vm1120 = vcmp.ge.f32.partialorder %v1116, 0.0
    %v1121 = vmul.f32 %v1113, 0.1
    %v1122 = vmul.f32 %v1114, 0.1
    %v1123 = vmul.f32 %v1115, 0.1
    %v1124 = vmul.f32 %v1116, 0.1
    %v1125 = vsel %vm1117, %v1113, %v1121
    %v1126 = vsel %vm1118, %v1114, %v1122
    %v1127 = vsel %vm1119, %v1115, %v1123
    %v1128 = vsel %vm1120, %v1116, %v1124
    %v1129 = vperm.slane %v34, 7
    %v1130 = vadd.f32 %v1105, %v1129
    %v1131 = vadd.f32 %v1107, %v1129
    %v1132 = vadd.f32 %v1109, %v1129
    %v1133 = vadd.f32 %v1111, %v1129
    %v1134 = vadd.f32 %v1125, %v1130
    %v1135 = vadd.f32 %v1126, %v1131
    %v1136 = vadd.f32 %v1127, %v1132
    %v1137 = vadd.f32 %v1128, %v1133
    %vm1138 = vcmp.lt.s32.totalorder %v989, 32
    %v1139 = vsel %vm1138, %v1134, 0.0
    %v1140 = vsel %vm1138, %v1135, 0.0
    %v1141 = vsel %vm1138, %v1136, 0.0
    %v1142 = vsel %vm1138, %v1137, 0.0
    %v1143 = vld [vmem:[#allocation2 + $0x40] sm:$0xf]
    %v1144 = vld [vmem:[#allocation2 + $0x44] sm:$0xf]
    %v1145 = vld [vmem:[#allocation2 + $0x48] sm:$0xf]
    %v1146 = vld [vmem:[#allocation2 + $0x4c] sm:$0xf]
    %v1147 = vld [vmem:[#allocation2 + $0x50] sm:$0xf]
    %v1148 = vld [vmem:[#allocation2 + $0x54] sm:$0xf]
    %v1149 = vld [vmem:[#allocation2 + $0x58] sm:$0xf]
    %v1150 = vld [vmem:[#allocation2 + $0x5c] sm:$0xf]
    %v1151 = vld [vmem:[#allocation2 + $0x60] sm:$0xf]
    %v1152 = vld [vmem:[#allocation2 + $0x64] sm:$0xf]
    %v1153 = vld [vmem:[#allocation2 + $0x68] sm:$0xf]
    %v1154 = vld [vmem:[#allocation2 + $0x6c] sm:$0xf]
    %v1155 = vld [vmem:[#allocation2 + $0x70] sm:$0xf]
    %v1156 = vld [vmem:[#allocation2 + $0x74] sm:$0xf]
    %v1157 = vld [vmem:[#allocation2 + $0x78] sm:$0xf]
    %v1158 = vld [vmem:[#allocation2 + $0x7c] sm:$0xf]
    %v1159 = vrot.slane %v1139, 6
    %v1160 = vrot.slane %v1140, 6
    %v1161 = vrot.slane %v1141, 6
    %v1162 = vrot.slane %v1142, 6
    %vm1163 = vcmp.lt.s32.totalorder %v936, 2
    %v1164 = vsel %vm1163, %v1161, %v1162
    %v1165 = vsel %vm1163, %v1160, %v1161
    %v1166 = vsel %vm1163, %v1159, %v1160
    %v1167 = vsel %vm1163, %v1162, %v1159
    %vm1168 = vcmp.ge.s32.totalorder %v984, 2
    %vm1169 = vcmp.ge.s32.totalorder %v985, 2
    %vm1170 = vcmp.ge.s32.totalorder %v986, 2
    %vm1171 = vcmp.ge.s32.totalorder %v987, 2
    %v1172 = vsel %vm1168, %v1167, 0.0
    %v1173 = vsel %vm1169, %v1166, 0.0
    %v1174 = vsel %vm1170, %v1165, 0.0
    %v1175 = vsel %vm1171, %v1164, 0.0
    %1176 = vrot.lane.b32.xlu0 %v1139, 32
    %v1177 = vpop.permute.xlu0 %1176
    %1178 = vrot.lane.b32.xlu0 %v1140, 32
    %v1179 = vpop.permute.xlu0 %1178
    %1180 = vrot.lane.b32.xlu0 %v1141, 32
    %v1181 = vpop.permute.xlu0 %1180
    %1182 = vrot.lane.b32.xlu0 %v1142, 32
    %v1183 = vpop.permute.xlu0 %1182
    %v1184 = vadd.f32 %v1172, %v1177
    %v1185 = vadd.f32 %v1173, %v1179
    %v1186 = vadd.f32 %v1174, %v1181
    %v1187 = vadd.f32 %v1175, %v1183
    %v1188 = vpack.c.bf16 %v1185, %v1184
    %v1189 = vpack.c.bf16 %v1187, %v1186
    %v1206 = vunpack.c.l.b16 %v1143
    %v1207 = vunpack.c.l.b16 %v1144
    %v1208 = vunpack.c.l.b16 %v1145
    %v1209 = vunpack.c.l.b16 %v1146
    %v1210 = vunpack.c.l.b16 %v1147
    %v1211 = vunpack.c.l.b16 %v1148
    %v1212 = vunpack.c.l.b16 %v1149
    %v1213 = vunpack.c.l.b16 %v1150
    %v1214 = vunpack.c.l.b16 %v1151
    %v1215 = vunpack.c.l.b16 %v1152
    %v1216 = vunpack.c.l.b16 %v1153
    %v1217 = vunpack.c.l.b16 %v1154
    %v1218 = vunpack.c.l.b16 %v1155
    %v1219 = vunpack.c.l.b16 %v1156
    %v1220 = vunpack.c.l.b16 %v1157
    %v1221 = vunpack.c.l.b16 %v1158
    %v1222 = vpack.c.b16 %v1207, %v1206
    %v1223 = vpack.c.b16 %v1209, %v1208
    %v1224 = vpack.c.b16 %v1211, %v1210
    %v1225 = vpack.c.b16 %v1213, %v1212
    %v1226 = vpack.c.b16 %v1215, %v1214
    %v1227 = vpack.c.b16 %v1217, %v1216
    %v1228 = vpack.c.b16 %v1219, %v1218
    %v1229 = vpack.c.b16 %v1221, %v1220
    %1238 = vmatpush.bf16.msra.mxu0 %v1229
    %1239 = vmatpush.bf16.msra.mxu0 %v1228
    %1240 = vmatpush.bf16.msra.mxu0 %v1227
    %1241 = vmatpush.bf16.msra.mxu0 %v1226
    %1242 = vmatpush.bf16.msra.mxu0 %v1225
    %1243 = vmatpush.bf16.msra.mxu0 %v1224
    %1244 = vmatpush.bf16.msra.mxu0 %v1223
    %1245 = vmatpush.bf16.msra.mxu0 %v1222
    %1246 = vmatmul.bf16.gmra.mxu0 %v1188
    %v1247 = vpop.f32.mrf.mxu0
    %v1248 = vadd.f32 0.0, %v1247
    %v1249 = vpop.f32.mrf.mxu0
    %v1250 = vadd.f32 0.0, %v1249
    %1251 = vmatmul.bf16.gmra.mxu0 %v1189
    %v1252 = vpop.f32.mrf.mxu0
    %v1253 = vadd.f32 0.0, %v1252
    %v1254 = vpop.f32.mrf.mxu0
    %v1255 = vadd.f32 0.0, %v1254
    %1256 = vdwg.mxu0
    %1257 = vrot.lane.b32.xlu0 %v1248, 96
    %v1258 = vpop.permute.xlu0 %1257
    %1259 = vrot.lane.b32.xlu0 %v1250, 96
    %v1260 = vpop.permute.xlu0 %1259
    %1261 = vrot.lane.b32.xlu0 %v1253, 96
    %v1262 = vpop.permute.xlu0 %1261
    %1263 = vrot.lane.b32.xlu0 %v1255, 96
    %v1264 = vpop.permute.xlu0 %1263
    %v1265 = vperm.slane %v35, 0
    %v1266 = vadd.f32 %v1248, %v1265
    %v1267 = vadd.f32 %v1250, %v1265
    %v1268 = vadd.f32 %v1253, %v1265
    %v1269 = vadd.f32 %v1255, %v1265
    %vm1270 = vcmp.ge.f32.partialorder %v1266, 0.0
    %vm1271 = vcmp.ge.f32.partialorder %v1267, 0.0
    %vm1272 = vcmp.ge.f32.partialorder %v1268, 0.0
    %vm1273 = vcmp.ge.f32.partialorder %v1269, 0.0
    %v1274 = vmul.f32 %v1266, 0.1
    %v1275 = vmul.f32 %v1267, 0.1
    %v1276 = vmul.f32 %v1268, 0.1
    %v1277 = vmul.f32 %v1269, 0.1
    %v1278 = vsel %vm1270, %v1266, %v1274
    %v1279 = vsel %vm1271, %v1267, %v1275
    %v1280 = vsel %vm1272, %v1268, %v1276
    %v1281 = vsel %vm1273, %v1269, %v1277
    %v1282 = vperm.slane %v35, 1
    %v1283 = vadd.f32 %v1258, %v1282
    %v1284 = vadd.f32 %v1260, %v1282
    %v1285 = vadd.f32 %v1262, %v1282
    %v1286 = vadd.f32 %v1264, %v1282
    %v1287 = vadd.f32 %v1278, %v1283
    %v1288 = vadd.f32 %v1279, %v1284
    %v1289 = vadd.f32 %v1280, %v1285
    %v1290 = vadd.f32 %v1281, %v1286
    %v1291 = vsel %vm1138, %v1287, 0.0
    %v1292 = vsel %vm1138, %v1288, 0.0
    %v1293 = vsel %vm1138, %v1289, 0.0
    %v1294 = vsel %vm1138, %v1290, 0.0
    %v1295 = vld [vmem:[#allocation2 + $0x80] sm:$0xf]
    %v1296 = vld [vmem:[#allocation2 + $0x84] sm:$0xf]
    %v1297 = vld [vmem:[#allocation2 + $0x88] sm:$0xf]
    %v1298 = vld [vmem:[#allocation2 + $0x8c] sm:$0xf]
    %v1299 = vld [vmem:[#allocation2 + $0x90] sm:$0xf]
    %v1300 = vld [vmem:[#allocation2 + $0x94] sm:$0xf]
    %v1301 = vld [vmem:[#allocation2 + $0x98] sm:$0xf]
    %v1302 = vld [vmem:[#allocation2 + $0x9c] sm:$0xf]
    %v1303 = vld [vmem:[#allocation2 + $0xa0] sm:$0xf]
    %v1304 = vld [vmem:[#allocation2 + $0xa4] sm:$0xf]
    %v1305 = vld [vmem:[#allocation2 + $0xa8] sm:$0xf]
    %v1306 = vld [vmem:[#allocation2 + $0xac] sm:$0xf]
    %v1307 = vld [vmem:[#allocation2 + $0xb0] sm:$0xf]
    %v1308 = vld [vmem:[#allocation2 + $0xb4] sm:$0xf]
    %v1309 = vld [vmem:[#allocation2 + $0xb8] sm:$0xf]
    %v1310 = vld [vmem:[#allocation2 + $0xbc] sm:$0xf]
    %v1311 = vrot.slane %v1291, 4
    %v1312 = vrot.slane %v1292, 4
    %v1313 = vrot.slane %v1293, 4
    %v1314 = vrot.slane %v1294, 4
    %vm1315 = vcmp.lt.s32.totalorder %v936, 4
    %v1316 = vsel %vm1315, %v1313, %v1314
    %v1317 = vsel %vm1315, %v1312, %v1313
    %v1318 = vsel %vm1315, %v1311, %v1312
    %v1319 = vsel %vm1315, %v1314, %v1311
    %vm1320 = vcmp.ge.s32.totalorder %v984, 4
    %vm1321 = vcmp.ge.s32.totalorder %v985, 4
    %vm1322 = vcmp.ge.s32.totalorder %v986, 4
    %vm1323 = vcmp.ge.s32.totalorder %v987, 4
    %v1324 = vsel %vm1320, %v1319, 0.0
    %v1325 = vsel %vm1321, %v1318, 0.0
    %v1326 = vsel %vm1322, %v1317, 0.0
    %v1327 = vsel %vm1323, %v1316, 0.0
    %1328 = vrot.lane.b32.xlu0 %v1291, 32
    %v1329 = vpop.permute.xlu0 %1328
    %1330 = vrot.lane.b32.xlu0 %v1292, 32
    %v1331 = vpop.permute.xlu0 %1330
    %1332 = vrot.lane.b32.xlu0 %v1293, 32
    %v1333 = vpop.permute.xlu0 %1332
    %1334 = vrot.lane.b32.xlu0 %v1294, 32
    %v1335 = vpop.permute.xlu0 %1334
    %v1336 = vadd.f32 %v1324, %v1329
    %v1337 = vadd.f32 %v1325, %v1331
    %v1338 = vadd.f32 %v1326, %v1333
    %v1339 = vadd.f32 %v1327, %v1335
    %v1340 = vpack.c.bf16 %v1337, %v1336
    %v1341 = vpack.c.bf16 %v1339, %v1338
    %v1358 = vunpack.c.l.b16 %v1295
    %v1359 = vunpack.c.l.b16 %v1296
    %v1360 = vunpack.c.l.b16 %v1297
    %v1361 = vunpack.c.l.b16 %v1298
    %v1362 = vunpack.c.l.b16 %v1299
    %v1363 = vunpack.c.l.b16 %v1300
    %v1364 = vunpack.c.l.b16 %v1301
    %v1365 = vunpack.c.l.b16 %v1302
    %v1366 = vunpack.c.l.b16 %v1303
    %v1367 = vunpack.c.l.b16 %v1304
    %v1368 = vunpack.c.l.b16 %v1305
    %v1369 = vunpack.c.l.b16 %v1306
    %v1370 = vunpack.c.l.b16 %v1307
    %v1371 = vunpack.c.l.b16 %v1308
    %v1372 = vunpack.c.l.b16 %v1309
    %v1373 = vunpack.c.l.b16 %v1310
    %v1374 = vpack.c.b16 %v1359, %v1358
    %v1375 = vpack.c.b16 %v1361, %v1360
    %v1376 = vpack.c.b16 %v1363, %v1362
    %v1377 = vpack.c.b16 %v1365, %v1364
    %v1378 = vpack.c.b16 %v1367, %v1366
    %v1379 = vpack.c.b16 %v1369, %v1368
    %v1380 = vpack.c.b16 %v1371, %v1370
    %v1381 = vpack.c.b16 %v1373, %v1372
    %1390 = vmatpush.bf16.msra.mxu0 %v1381
    %1391 = vmatpush.bf16.msra.mxu0 %v1380
    %1392 = vmatpush.bf16.msra.mxu0 %v1379
    %1393 = vmatpush.bf16.msra.mxu0 %v1378
    %1394 = vmatpush.bf16.msra.mxu0 %v1377
    %1395 = vmatpush.bf16.msra.mxu0 %v1376
    %1396 = vmatpush.bf16.msra.mxu0 %v1375
    %1397 = vmatpush.bf16.msra.mxu0 %v1374
    %1398 = vmatmul.bf16.gmra.mxu0 %v1340
    %v1399 = vpop.f32.mrf.mxu0
    %v1400 = vadd.f32 0.0, %v1399
    %v1401 = vpop.f32.mrf.mxu0
    %v1402 = vadd.f32 0.0, %v1401
    %1403 = vmatmul.bf16.gmra.mxu0 %v1341
    %v1404 = vpop.f32.mrf.mxu0
    %v1405 = vadd.f32 0.0, %v1404
    %v1406 = vpop.f32.mrf.mxu0
    %v1407 = vadd.f32 0.0, %v1406
    %1408 = vdwg.mxu0
    %1409 = vrot.lane.b32.xlu0 %v1400, 96
    %v1410 = vpop.permute.xlu0 %1409
    %1411 = vrot.lane.b32.xlu0 %v1402, 96
    %v1412 = vpop.permute.xlu0 %1411
    %1413 = vrot.lane.b32.xlu0 %v1405, 96
    %v1414 = vpop.permute.xlu0 %1413
    %1415 = vrot.lane.b32.xlu0 %v1407, 96
    %v1416 = vpop.permute.xlu0 %1415
    %v1417 = vperm.slane %v35, 2
    %v1418 = vadd.f32 %v1400, %v1417
    %v1419 = vadd.f32 %v1402, %v1417
    %v1420 = vadd.f32 %v1405, %v1417
    %v1421 = vadd.f32 %v1407, %v1417
    %vm1422 = vcmp.ge.f32.partialorder %v1418, 0.0
    %vm1423 = vcmp.ge.f32.partialorder %v1419, 0.0
    %vm1424 = vcmp.ge.f32.partialorder %v1420, 0.0
    %vm1425 = vcmp.ge.f32.partialorder %v1421, 0.0
    %v1426 = vmul.f32 %v1418, 0.1
    %v1427 = vmul.f32 %v1419, 0.1
    %v1428 = vmul.f32 %v1420, 0.1
    %v1429 = vmul.f32 %v1421, 0.1
    %v1430 = vsel %vm1422, %v1418, %v1426
    %v1431 = vsel %vm1423, %v1419, %v1427
    %v1432 = vsel %vm1424, %v1420, %v1428
    %v1433 = vsel %vm1425, %v1421, %v1429
    %v1434 = vperm.slane %v35, 3
    %v1435 = vadd.f32 %v1410, %v1434
    %v1436 = vadd.f32 %v1412, %v1434
    %v1437 = vadd.f32 %v1414, %v1434
    %v1438 = vadd.f32 %v1416, %v1434
    %v1439 = vadd.f32 %v1430, %v1435
    %v1440 = vadd.f32 %v1431, %v1436
    %v1441 = vadd.f32 %v1432, %v1437
    %v1442 = vadd.f32 %v1433, %v1438
    %v1443 = vsel %vm1138, %v1439, 0.0
    %v1444 = vsel %vm1138, %v1440, 0.0
    %v1445 = vsel %vm1138, %v1441, 0.0
    %v1446 = vsel %vm1138, %v1442, 0.0
    %v1447 = vld [vmem:[#allocation2 + $0xc0] sm:$0xf]
    %v1448 = vld [vmem:[#allocation2 + $0xc4] sm:$0xf]
    %v1449 = vld [vmem:[#allocation2 + $0xc8] sm:$0xf]
    %v1450 = vld [vmem:[#allocation2 + $0xcc] sm:$0xf]
    %v1451 = vld [vmem:[#allocation2 + $0xd0] sm:$0xf]
    %v1452 = vld [vmem:[#allocation2 + $0xd4] sm:$0xf]
    %v1453 = vld [vmem:[#allocation2 + $0xd8] sm:$0xf]
    %v1454 = vld [vmem:[#allocation2 + $0xdc] sm:$0xf]
    %v1455 = vld [vmem:[#allocation2 + $0xe0] sm:$0xf]
    %v1456 = vld [vmem:[#allocation2 + $0xe4] sm:$0xf]
    %v1457 = vld [vmem:[#allocation2 + $0xe8] sm:$0xf]
    %v1458 = vld [vmem:[#allocation2 + $0xec] sm:$0xf]
    %v1459 = vld [vmem:[#allocation2 + $0xf0] sm:$0xf]
    %v1460 = vld [vmem:[#allocation2 + $0xf4] sm:$0xf]
    %v1461 = vld [vmem:[#allocation2 + $0xf8] sm:$0xf]
    %v1462 = vld [vmem:[#allocation2 + $0xfc] sm:$0xf]
    %v1463 = vpack.c.bf16 %v1444, %v1443
    %v1464 = vpack.c.bf16 %v1446, %v1445
    %v1465 = vperm.slane %v35, 4
    %v1482 = vunpack.c.l.b16 %v1447
    %v1483 = vunpack.c.l.b16 %v1448
    %v1484 = vunpack.c.l.b16 %v1449
    %v1485 = vunpack.c.l.b16 %v1450
    %v1486 = vunpack.c.l.b16 %v1451
    %v1487 = vunpack.c.l.b16 %v1452
    %v1488 = vunpack.c.l.b16 %v1453
    %v1489 = vunpack.c.l.b16 %v1454
    %v1490 = vunpack.c.l.b16 %v1455
    %v1491 = vunpack.c.l.b16 %v1456
    %v1492 = vunpack.c.l.b16 %v1457
    %v1493 = vunpack.c.l.b16 %v1458
    %v1494 = vunpack.c.l.b16 %v1459
    %v1495 = vunpack.c.l.b16 %v1460
    %v1496 = vunpack.c.l.b16 %v1461
    %v1497 = vunpack.c.l.b16 %v1462
    %v1498 = vpack.c.b16 %v1483, %v1482
    %v1499 = vpack.c.b16 %v1485, %v1484
    %v1500 = vpack.c.b16 %v1487, %v1486
    %v1501 = vpack.c.b16 %v1489, %v1488
    %v1502 = vpack.c.b16 %v1491, %v1490
    %v1503 = vpack.c.b16 %v1493, %v1492
    %v1504 = vpack.c.b16 %v1495, %v1494
    %v1505 = vpack.c.b16 %v1497, %v1496
    %1514 = vmatpush.bf16.msra.mxu0 %v1505
    %1515 = vmatpush.bf16.msra.mxu0 %v1504
    %1516 = vmatpush.bf16.msra.mxu0 %v1503
    %1517 = vmatpush.bf16.msra.mxu0 %v1502
    %1518 = vmatpush.bf16.msra.mxu0 %v1501
    %1519 = vmatpush.bf16.msra.mxu0 %v1500
    %1520 = vmatpush.bf16.msra.mxu0 %v1499
    %1521 = vmatpush.bf16.msra.mxu0 %v1498
    %1522 = vmatmul.bf16.gmra.mxu0 %v1463
    %v1523 = vpop.f32.mrf.mxu0
    %v1524 = vadd.f32 %v1465, %v1523
    %v1525 = vpop.f32.mrf.mxu0
    %v1526 = vadd.f32 %v1465, %v1525
    %1527 = vmatmul.bf16.gmra.mxu0 %v1464
    %v1528 = vpop.f32.mrf.mxu0
    %v1529 = vadd.f32 %v1465, %v1528
    %v1530 = vpop.f32.mrf.mxu0
    %v1531 = vadd.f32 %v1465, %v1530
    %1532 = vdwg.mxu0
    %vm1533 = vcmp.ge.f32.partialorder %v1524, 0.0
    %vm1534 = vcmp.ge.f32.partialorder %v1526, 0.0
    %vm1535 = vcmp.ge.f32.partialorder %v1529, 0.0
    %vm1536 = vcmp.ge.f32.partialorder %v1531, 0.0
    %v1537 = vmul.f32 %v1524, 0.1
    %v1538 = vmul.f32 %v1526, 0.1
    %v1539 = vmul.f32 %v1529, 0.1
    %v1540 = vmul.f32 %v1531, 0.1
    %v1541 = vsel %vm1533, %v1524, %v1537
    %v1542 = vsel %vm1534, %v1526, %v1538
    %v1543 = vsel %vm1535, %v1529, %v1539
    %v1544 = vsel %vm1536, %v1531, %v1540
    %v1545 = vmul.f32 %v1541, %v709
    %v1546 = vmul.f32 %v1542, %v714
    %v1547 = vmul.f32 %v1543, %v719
    %v1548 = vmul.f32 %v1544, %v724
    %1549 = vst [vmem:[#allocation5] sm:$0xff] %v1545
    %1550 = vst [vmem:[#allocation5 + $0x8] sm:$0xff] %v1546
    %1551 = vst [vmem:[#allocation5 + $0x10] sm:$0xff] %v1547
    %1552 = vst [vmem:[#allocation5 + $0x18] sm:$0xff] %v1548
    // Predicated region
    $region22: #{wavenet_forward.1} parent=1 // pred_check
      _
    $region23: #{wavenet_forward.1} parent=1 // pred_check_branch
      %1554 = sbr.rel (0) target = $region25
    $region24: #{wavenet_forward.1} parent=1 // pred_region
      %1556 = vsyncadd [#allocation4], 0
      %s1557 = sshll.u32 [#allocation5], 4
      %s1558 = int_to_ptr.vmem [resolvable:$true] %s1557
      %s1559 = sshll.u32 %s4, 4
      %s1560 = int_to_ptr.hbm [resolvable:$true] %s1559
      %1565 = dma.vmem_to_hbm [thread:$0]  %s1558, 512, %s1560, [#allocation4], 128, 128, 8
    $region25: #{wavenet_forward.1} parent=1 // pred_fallthru
      _
    // Predicated region
    $region26: #{wavenet_forward.1} parent=1 // pred_check
      _
    $region27: #{wavenet_forward.1} parent=1 // pred_check_branch
      %1567 = sbr.rel (0) target = $region29
    $region28: #{wavenet_forward.1} parent=1 // pred_region
      %1569 = dma.done [#allocation4], 512
    $region29: #{wavenet_forward.1} parent=1 // pred_fallthru
      _
    %1570 = vsyncpa [#allocation3], 1
    %1571 = vsyncpa [#allocation4], 1

</llo_original>
